<compile_context>
chip_gen: v6e
topology: v6e:2x2x1
jax: 0.10.0
libtpu: 0.0.40
codegen_flags: <defaults>
</compile_context>

<pallas_src>
import numpy as np
import jax
import jax.numpy as jnp
from jax import lax
from jax.experimental import pallas as pl
from jax.experimental.pallas import tpu as pltpu


# ----------------------------------------------------------------------------
# build_matrix: faithful numpy port of DPConv2D.build_matrix
# ----------------------------------------------------------------------------
def build_matrix(weight, bias, *, in_channels, out_channels, kernel_size,
                 stride, padding, in_h, in_w, out_h, out_w):
    weight = np.asarray(weight, dtype=np.float32)
    bias = np.asarray(bias, dtype=np.float32)
    padded_w = in_w + 2 * padding
    padded_h = in_h + 2 * padding
    padded_sp = padded_h * padded_w
    res = np.zeros((out_h * out_w * out_channels, padded_sp * in_channels),
                   dtype=np.float32)
    len_row_fillers = ((in_channels - 1) * padded_sp
                       + (kernel_size - 1) * padded_w + kernel_size)
    row_fillers = np.zeros((out_channels, len_row_fillers), dtype=np.float32)
    for oc in range(out_channels):
        for ic in range(in_channels):
            for kr in range(kernel_size):
                start = ic * padded_sp + kr * padded_w
                row_fillers[oc, start:start + kernel_size] = weight[oc, ic, kr]
    for oc in range(out_channels):
        for oh in range(out_h):
            for ow in range(out_w):
                row_off = oh * stride * padded_w + ow * stride
                idx = oc * out_h * out_w + oh * out_w + ow
                res[idx, row_off:row_off + len_row_fillers] = row_fillers[oc]
    # delete the columns corresponding to zero-padding positions
    del_cols = []
    for ic in range(in_channels):
        for ih in range(padded_h):
            for iw in range(padded_w):
                if iw < padding or iw >= padding + in_w:
                    del_cols.append(ic * padded_sp + ih * padded_w + iw)
            if ih < padding or ih >= padding + in_h:
                start = ic * padded_sp + ih * padded_w
                del_cols += list(range(start, start + padded_w))
    if del_cols:
        del_cols = np.unique(np.array(del_cols, dtype=np.int64))
        res = np.delete(res, del_cols, axis=1)
    bias_col = np.repeat(bias, out_w * out_h)[:, None]
    return np.concatenate([res, bias_col], axis=1)  # (out_features, in_features+1)


# ----------------------------------------------------------------------------
# Pallas kernels: Y = X @ W^T + b   (the conv expressed via the DP matrix)
# ----------------------------------------------------------------------------
def _affine_kernel(x_ref, wt_ref, b_ref, o_ref):
    # Fast path: full-K stripe per step, no reduction axis.
    o_ref[...] = (jnp.dot(x_ref[...], wt_ref[...],
                          preferred_element_type=jnp.float32)
                  + b_ref[...]).astype(o_ref.dtype)


def _affine_kernel_ktiled(x_ref, wt_ref, b_ref, o_ref, acc_ref):
    # Robust path: K-reduction grid axis with a resident accumulator.
    k = pl.program_id(1)

    @pl.when(k == 0)
    def _():
        acc_ref[...] = jnp.zeros_like(acc_ref)

    acc_ref[...] += jnp.dot(x_ref[...], wt_ref[...],
                            preferred_element_type=jnp.float32)

    @pl.when(k == pl.num_programs(1) - 1)
    def _():
        o_ref[...] = (acc_ref[...] + b_ref[...]).astype(o_ref.dtype)


def _round_up(v, m):
    return ((v + m - 1) // m) * m


# Keep the working set comfortably under the 32 MiB scoped-VMEM default
# (also valid on v7x where physical VMEM is 64 MiB).
_VMEM_BUDGET_BYTES = 24 * 1024 * 1024


def dp_affine_apply(x_flat, wt, bias_row, *, tn=512):
    """x_flat: (B, K), wt: (K, N), bias_row: (1, N) -> (B, N).

    Shapes are zero-padded internally (B -> mult. of 8, K -> mult. of 128,
    N -> mult. of the N-tile) so arbitrary conv geometries work; the result is
    sliced back to (B, N).
    """
    B, K = x_flat.shape
    K2, N = wt.shape
    assert K == K2 and bias_row.shape == (1, N)

    B_pad = _round_up(max(B, 1), 8)
    K_pad = _round_up(K, 128)

    # Choose the N-tile: prefer 512-wide stripes, but keep >= 2 grid steps
    # along N when the layer allows so both v7x TensorCores participate and
    # the W-stream DMA overlaps with compute.
    N_pad = _round_up(N, 128)
    if N_pad < 2 * tn:
        tn = N_pad if N_pad < 256 else _round_up(N_pad // 2, 128)
    N_pad = _round_up(N_pad, tn)
    n_steps = N_pad // tn

    x_p = jnp.pad(x_flat.astype(jnp.float32),
                  ((0, B_pad - B), (0, K_pad - K)))
    wt_p = jnp.pad(wt.astype(jnp.float32),
                   ((0, K_pad - K), (0, N_pad - N)))
    b_p = jnp.pad(bias_row.astype(jnp.float32), ((0, 0), (0, N_pad - N)))

    cost = pl.CostEstimate(
        flops=2 * B_pad * K_pad * N_pad,
        transcendentals=0,
        bytes_accessed=(K_pad * N_pad * 4      # W stream (dominant)
                        + B_pad * K_pad * 4    # X
                        + B_pad * N_pad * 4    # Y
                        + N_pad * 4),          # bias
    )

    # VMEM footprint of the fast path: resident X + double-buffered W stripe
    # + double-buffered output tile + double-buffered bias slice.
    fast_vmem = (B_pad * K_pad * 4
                 + 2 * K_pad * tn * 4
                 + 2 * B_pad * tn * 4
                 + 2 * tn * 4)

    if fast_vmem <= _VMEM_BUDGET_BYTES:
        out = pl.pallas_call(
            _affine_kernel,
            out_shape=jax.ShapeDtypeStruct((B_pad, N_pad), jnp.float32),
            grid_spec=pltpu.PrefetchScalarGridSpec(
                num_scalar_prefetch=0,
                grid=(n_steps,),
                in_specs=[
                    pl.BlockSpec((B_pad, K_pad), lambda n: (0, 0)),  # X resident
                    pl.BlockSpec((K_pad, tn), lambda n: (0, n)),     # full-K W stripe
                    pl.BlockSpec((1, tn), lambda n: (0, n)),         # bias column of M
                ],
                out_specs=pl.BlockSpec((B_pad, tn), lambda n: (0, n)),
            ),
            compiler_params=pltpu.CompilerParams(
                dimension_semantics=("parallel",)),
            cost_estimate=cost,
        )(x_p, wt_p, b_p)
        return out[:B, :N]

    # Robust path for very large conv layers: tile K as well.
    tk = 512
    while (B_pad * tk * 4 * 2 + 2 * tk * tn * 4 + 3 * B_pad * tn * 4
           + 2 * tn * 4) > _VMEM_BUDGET_BYTES and tk > 128:
        tk //= 2
    K_pad2 = _round_up(K_pad, tk)
    if K_pad2 != K_pad:
        x_p = jnp.pad(x_p, ((0, 0), (0, K_pad2 - K_pad)))
        wt_p = jnp.pad(wt_p, ((0, K_pad2 - K_pad), (0, 0)))
        K_pad = K_pad2
    k_steps = K_pad // tk

    out = pl.pallas_call(
        _affine_kernel_ktiled,
        out_shape=jax.ShapeDtypeStruct((B_pad, N_pad), jnp.float32),
        grid_spec=pltpu.PrefetchScalarGridSpec(
            num_scalar_prefetch=0,
            grid=(n_steps, k_steps),                 # reduction axis last
            in_specs=[
                pl.BlockSpec((B_pad, tk), lambda n, k: (0, k)),
                pl.BlockSpec((tk, tn), lambda n, k: (k, n)),
                pl.BlockSpec((1, tn), lambda n, k: (0, n)),
            ],
            out_specs=pl.BlockSpec((B_pad, tn), lambda n, k: (0, n)),
            scratch_shapes=[pltpu.VMEM((B_pad, tn), jnp.float32)],
        ),
        compiler_params=pltpu.CompilerParams(
            dimension_semantics=("parallel", "arbitrary")),
        cost_estimate=cost,
    )(x_p, wt_p, b_p)
    return out[:B, :N]


# ----------------------------------------------------------------------------
# DPConv2D wrapper
# ----------------------------------------------------------------------------
class DPConv2DPallas:
    def __init__(self, weight, bias, *, in_features, stride=1, padding=1):
        self.out_channels, self.in_channels, self.kernel_size, _ = weight.shape
        assert in_features % self.in_channels == 0
        self.in_h = self.in_w = int(np.sqrt(in_features // self.in_channels))
        self.stride, self.padding = stride, padding
        self.out_h = (self.in_h + 2 * padding - self.kernel_size) // stride + 1
        self.out_w = (self.in_w + 2 * padding - self.kernel_size) // stride + 1
        self.in_features = in_features
        self.out_features = self.out_channels * self.out_h * self.out_w
        m = build_matrix(weight, bias,
                         in_channels=self.in_channels,
                         out_channels=self.out_channels,
                         kernel_size=self.kernel_size,
                         stride=stride, padding=padding,
                         in_h=self.in_h, in_w=self.in_w,
                         out_h=self.out_h, out_w=self.out_w)
        # forward() installs this as lb/ub/slb/sub of the abstract element.
        # Kept in float32: bf16 rounding would break DeepPoly bound soundness.
        self.matrix = jnp.asarray(m)                       # (out_feat, in_feat+1)
        self.wt = jnp.asarray(m[:, :-1].T.copy())          # (in_feat, out_feat)
        self.bias_row = jnp.asarray(m[:, -1][None, :])     # (1, out_feat)

    def apply(self, x_nchw):
        # TODO(synk): the x.resolve() back-substitution loop belongs to the
        # external DeepPoly domain object; callers with many bound matrices
        # (lb/ub/slb/sub rows) should stack them into one dp_affine_apply call
        # so the dense M is streamed from HBM once for all of them.
        B = x_nchw.shape[0]
        x_flat = x_nchw.reshape(B, self.in_features).astype(jnp.float32)
        y = dp_affine_apply(x_flat, self.wt, self.bias_row)
        return y.reshape(B, self.out_channels, self.out_h, self.out_w)


if __name__ == "__main__":
    key = jax.random.PRNGKey(0)
    kw, kb, kx = jax.random.split(key, 3)

    B, C_in, H, W = 2, 4, 16, 16
    C_out, K = 8, 3
    in_features = C_in * H * W

    weight = (jax.random.normal(kw, (C_out, C_in, K, K), jnp.float32)
              * (1.0 / np.sqrt(C_in * K * K)))
    bias = jax.random.normal(kb, (C_out,), jnp.float32) * 0.1
    x = jax.random.normal(kx, (B, C_in, H, W), jnp.float32)

    layer = DPConv2DPallas(np.asarray(weight), np.asarray(bias),
                           in_features=in_features, stride=1, padding=1)

    y = layer.apply(x)
    y = jax.block_until_ready(y)

    # Reference: direct convolution (NCHW, OIHW), same semantics as nn.Conv2d.
    y_ref = lax.conv_general_dilated(
        x, weight, window_strides=(1, 1), padding=((1, 1), (1, 1)),
        dimension_numbers=("NCHW", "OIHW", "NCHW"),
    ) + bias[None, :, None, None]

    np.testing.assert_allclose(np.asarray(y), np.asarray(y_ref),
                               rtol=1e-4, atol=1e-4)
    print("KERNEL_OK")
</pallas_src>

<mosaic_0001>
module attributes {stable_mosaic.version = 11 : i64} {
  func.func @_affine_kernel(%arg0: i32, %arg1: memref<8x1024xf32, #tpu.memory_space<vmem>>, %arg2: memref<1024x512xf32, #tpu.memory_space<vmem>>, %arg3: memref<1x512xf32, #tpu.memory_space<vmem>>, %arg4: memref<8x512xf32, #tpu.memory_space<vmem>>) attributes {dimension_semantics = [#tpu.dimension_semantics<parallel>], iteration_bounds = array<i64: 4>, scalar_prefetch = 0 : i64, scratch_operands = 0 : i64, tpu.core_type = #tpu.core_type<tc>, window_params = [{pipeline_mode = #tpu.pipeline_mode<synchronous>, transform_indices = @transform_0, window_bounds = array<i64: 8, 1024>}, {transform_indices = @transform_1, window_bounds = array<i64: 1024, 512>}, {transform_indices = @transform_2, window_bounds = array<i64: 1, 512>}, {transform_indices = @transform_3, window_bounds = array<i64: 8, 512>}]} {
    %c0 = arith.constant 0 : index
    %c0_0 = arith.constant 0 : index
    %0 = vector.load %arg1[%c0, %c0_0] : memref<8x1024xf32, #tpu.memory_space<vmem>>, vector<8x1024xf32>
    %c0_1 = arith.constant 0 : index
    %c0_2 = arith.constant 0 : index
    %1 = vector.load %arg2[%c0_1, %c0_2] : memref<1024x512xf32, #tpu.memory_space<vmem>>, vector<1024x512xf32>
    %cst = arith.constant dense<0.000000e+00> : vector<8x512xf32>
    %2 = tpu.matmul %0, %1, %cst {dimension_numbers = #tpu.dot_dimension_numbers<[1], [0], [0], [1], [0, 0, 1, 1], [], []>} : vector<8x1024xf32>, vector<1024x512xf32>, vector<8x512xf32> -> vector<8x512xf32>
    %c0_3 = arith.constant 0 : index
    %c0_4 = arith.constant 0 : index
    %3 = vector.load %arg3[%c0_3, %c0_4] : memref<1x512xf32, #tpu.memory_space<vmem>>, vector<1x512xf32>
    %4 = vector.broadcast %3 : vector<1x512xf32> to vector<8x512xf32>
    %5 = arith.addf %2, %4 : vector<8x512xf32>
    %c0_5 = arith.constant 0 : index
    %c0_6 = arith.constant 0 : index
    %6 = vector.load %arg4[%c0_5, %c0_6] : memref<8x512xf32, #tpu.memory_space<vmem>>, vector<8x512xf32>
    tpu.vector_store %arg4[%c0_5, %c0_6], %5 {strides = array<i32>} : memref<8x512xf32, #tpu.memory_space<vmem>>, vector<8x512xf32>,
    return
  }
  func.func @transform_0(%arg0: i32) -> (i32, i32) {
    %c0_i32 = arith.constant 0 : i32
    %c0_i32_0 = arith.constant 0 : i32
    %c0_i32_1 = arith.constant 0 : i32
    return %c0_i32, %c0_i32_0 : i32, i32
  }
  func.func @transform_1(%arg0: i32) -> (i32, i32) {
    %c0_i32 = arith.constant 0 : i32
    %c0_i32_0 = arith.constant 0 : i32
    return %c0_i32, %arg0 : i32, i32
  }
  func.func @transform_2(%arg0: i32) -> (i32, i32) {
    %c0_i32 = arith.constant 0 : i32
    %c0_i32_0 = arith.constant 0 : i32
    return %c0_i32, %arg0 : i32, i32
  }
  func.func @transform_3(%arg0: i32) -> (i32, i32) {
    %c0_i32 = arith.constant 0 : i32
    %c0_i32_0 = arith.constant 0 : i32
    return %c0_i32, %arg0 : i32, i32
  }
}

</mosaic_0001>

<llo_original>
// kernel: tpu_custom_call.1
$region0: #{tpu_custom_call.1}
  #allocation0 [shape = 'u32[]', space=smem, size = 0x4, offset = 0x4, fixed_abs, tag = 'smem constant byte address 0x4 - core index']
  #allocation1 [shape = 'u32[144,128]{1,0:T(1,128)}', space=vmem, size = 0x12000, scoped, tag = 'internal scratch']
  %s0 = inlined_call_operand.hbm [shape: f32[8,1024], index: 0, kind: input, shape index: {}]
  %s1 = inlined_call_operand.hbm [shape: f32[1024,2048], index: 1, kind: input, shape index: {}]
  %s2 = inlined_call_operand.hbm [shape: f32[1,2048], index: 2, kind: input, shape index: {}]
  %s3 = inlined_call_operand.hbm [shape: f32[8,2048], index: 3, kind: output, shape index: {}]
  %s4 = sld [smem:[#allocation0]]
  $region57: #{tpu_custom_call.1} parent=0
    _
  %s6 = ssub.s32 1, %s4
  %s7 = scalar_select 0, %s6, %s4
  $region1: #{tpu_custom_call.1} parent=0
    #allocation2 [shape = 'u8[32768]{0}', space=vmem, size = 0x8000, scoped, tag = 'input window, operand 0, single buffered']
    #allocation3 [shape = 's32[2]{0}', space=sflag, size = 0x8, scoped, tag = 'scoped memory for tpu_custom_call.1']
    #allocation4 [shape = 's32[2]{0}', space=sflag, size = 0x8, scoped, tag = 'scoped memory for tpu_custom_call.1']
    #allocation5 [shape = 'u8[4194304]{0}', space=vmem, size = 0x400000, scoped, tag = 'input window, operand 1']
    #allocation6 [shape = 's32[2]{0}', space=sflag, size = 0x8, scoped, tag = 'scoped memory for tpu_custom_call.1']
    #allocation7 [shape = 'u8[4096]{0}', space=vmem, size = 0x1000, scoped, tag = 'input window, operand 2']
    #allocation8 [shape = 'u8[32768]{0}', space=vmem, size = 0x8000, scoped, tag = 'output window, operand 0']
    %8 = vsyncpa [#allocation3], 0
    %9 = vsyncpa [#allocation6], 0
    %s10 = scalar_lea.sflag [#allocation6], 1
    %11 = vsyncpa %s10, 0
    %12 = vsyncpa [#allocation4], 0
    %s13 = scalar_lea.sflag [#allocation4], 1
    %14 = vsyncpa %s13, 0
    loop: start=0, step=1, limit=6
    $region2: #{tpu_custom_call.1} parent=1 // loop_pre_header
      _
    $region3: #{tpu_custom_call.1} parent=1 // loop_header
      %s16 = sphi 0, %s20
      %p17 = scmp.ge.s32.totalorder %s16, 6
      %s24 = sphi 0, %s24
      %s26 = sphi 0, %s24
      %s27 = sphi 0, %s26
      %s41 = sphi 0, %s27
      %s47 = sphi 0, %s49
      %s50 = sphi 0, %s47
      %s51 = sphi 0, %s50
      %s67 = sphi 0, %s51
      %s73 = sphi 0, %s75
      %s76 = sphi 0, %s73
      %s77 = sphi 0, %s76
      %s93 = sphi 0, %s77
      %s99 = sphi 0, %s101
      %s102 = sphi 0, %s99
      %s103 = sphi 0, %s102
      %s119 = sphi 0, %s103
    $region4: #{tpu_custom_call.1} parent=1 // loop_header_branch
      %19 = sbr.rel (%p17) target = $region8
    $region5: #{tpu_custom_call.1} parent=1 // loop_body
      %s21 = ssub.s32 %s16, 1
      %s22 = ssub.s32 %s16, 2
      %s23 = sadd.s32 %s16, 1
      %s25 = sadd.s32 %s24, 1
      %p28 = scmp.eq.s32.totalorder %s16, 3
      %p29 = scmp.ne.s32.totalorder %s24, %s26
      %p30 = scmp.eq.s32.totalorder %s16, 0
      %p31 = por %p29, %p30
      %p32 = scmp.ne.s32.totalorder %s24, %s26
      %p33 = scmp.eq.s32.totalorder %s21, 3
      %p34 = por %p32, %p33
      %p35 = scmp.ne.s32.totalorder %s26, %s27
      %p36 = scmp.eq.s32.totalorder %s21, 0
      %p37 = por %p35, %p36
      %p38 = scmp.ne.s32.totalorder %s26, %s27
      %p39 = scmp.eq.s32.totalorder %s22, 3
      %p40 = por %p38, %p39
      %p42 = scmp.ne.s32.totalorder %s27, %s41
      %p43 = scmp.eq.s32.totalorder %s22, 0
      %p44 = por %p42, %p43
      %s45 = ssub.s32 %s16, %s23
      %p46 = scmp.eq.s32.totalorder %s45, 0
      %s48 = sadd.s32 %s47, 1
      %s49 = scalar_select %p46, %s47, %s48
      %p52 = pneg %p46
      %p53 = scmp.eq.s32.totalorder %s16, 3
      %p54 = por %p52, %p53
      %p55 = scmp.ne.s32.totalorder %s47, %s50
      %p56 = scmp.eq.s32.totalorder %s16, 0
      %p57 = por %p55, %p56
      %p58 = scmp.ne.s32.totalorder %s47, %s50
      %p59 = scmp.eq.s32.totalorder %s21, 3
      %p60 = por %p58, %p59
      %p61 = scmp.ne.s32.totalorder %s50, %s51
      %p62 = scmp.eq.s32.totalorder %s21, 0
      %p63 = por %p61, %p62
      %p64 = scmp.ne.s32.totalorder %s50, %s51
      %p65 = scmp.eq.s32.totalorder %s22, 3
      %p66 = por %p64, %p65
      %p68 = scmp.ne.s32.totalorder %s51, %s67
      %p69 = scmp.eq.s32.totalorder %s22, 0
      %p70 = por %p68, %p69
      %s71 = ssub.s32 %s16, %s23
      %p72 = scmp.eq.s32.totalorder %s71, 0
      %s74 = sadd.s32 %s73, 1
      %s75 = scalar_select %p72, %s73, %s74
      %p78 = pneg %p72
      %p79 = scmp.eq.s32.totalorder %s16, 3
      %p80 = por %p78, %p79
      %p81 = scmp.ne.s32.totalorder %s73, %s76
      %p82 = scmp.eq.s32.totalorder %s16, 0
      %p83 = por %p81, %p82
      %p84 = scmp.ne.s32.totalorder %s73, %s76
      %p85 = scmp.eq.s32.totalorder %s21, 3
      %p86 = por %p84, %p85
      %p87 = scmp.ne.s32.totalorder %s76, %s77
      %p88 = scmp.eq.s32.totalorder %s21, 0
      %p89 = por %p87, %p88
      %p90 = scmp.ne.s32.totalorder %s76, %s77
      %p91 = scmp.eq.s32.totalorder %s22, 3
      %p92 = por %p90, %p91
      %p94 = scmp.ne.s32.totalorder %s77, %s93
      %p95 = scmp.eq.s32.totalorder %s22, 0
      %p96 = por %p94, %p95
      %s97 = ssub.s32 %s16, %s23
      %p98 = scmp.eq.s32.totalorder %s97, 0
      %s100 = sadd.s32 %s99, 1
      %s101 = scalar_select %p98, %s99, %s100
      %p104 = pneg %p98
      %p105 = scmp.eq.s32.totalorder %s16, 3
      %p106 = por %p104, %p105
      %p107 = scmp.ne.s32.totalorder %s99, %s102
      %p108 = scmp.eq.s32.totalorder %s16, 0
      %p109 = por %p107, %p108
      %p110 = scmp.ne.s32.totalorder %s99, %s102
      %p111 = scmp.eq.s32.totalorder %s21, 3
      %p112 = por %p110, %p111
      %p113 = scmp.ne.s32.totalorder %s102, %s103
      %p114 = scmp.eq.s32.totalorder %s21, 0
      %p115 = por %p113, %p114
      %p116 = scmp.ne.s32.totalorder %s102, %s103
      %p117 = scmp.eq.s32.totalorder %s22, 3
      %p118 = por %p116, %p117
      %p120 = scmp.ne.s32.totalorder %s103, %s119
      %p121 = scmp.eq.s32.totalorder %s22, 0
      %p122 = por %p120, %p121
      %p123 = scmp.le.s32.totalorder 1, %s16
      %p124 = scmp.lt.s32.totalorder %s16, 5
      %p125 = pnand %p123, %p124
      %p126 = pneg %p125
      // Predicated region
      $region9: #{tpu_custom_call.1} parent=5 // pred_check
        _
      $region10: #{tpu_custom_call.1} parent=5 // pred_check_branch
        %128 = sbr.rel (%p125) target = $region12
      $region11: #{tpu_custom_call.1} parent=5 // pred_region
        %s129 = ssub.s32 %s16, 1
        // Predicated region
        $region13: #{tpu_custom_call.1} parent=11 // pred_check
          %p130 = pneg %p37
        $region14: #{tpu_custom_call.1} parent=11 // pred_check_branch
          %132 = sbr.rel (%p130) target = $region16
        $region15: #{tpu_custom_call.1} parent=11 // pred_region
          %s134 = ssub.s32 1024, 1024
          %135 = vsyncadd [#allocation3], %s134
          %s137 = sshll.u32 [#allocation2], 4
          %s138 = int_to_ptr.vmem [resolvable:$true] %s137
          %140 = dma.hbm_to_vmem [thread:$0]  %s0, 1024, %s138, [#allocation3]
        $region16: #{tpu_custom_call.1} parent=11 // pred_fallthru
          _
      $region12: #{tpu_custom_call.1} parent=5 // pred_fallthru
        _
      %p141 = scmp.lt.s32.totalorder %s16, 4
      // Predicated region
      $region17: #{tpu_custom_call.1} parent=5 // pred_check
        %p142 = pneg %p141
      $region18: #{tpu_custom_call.1} parent=5 // pred_check_branch
        %144 = sbr.rel (%p142) target = $region20
      $region19: #{tpu_custom_call.1} parent=5 // pred_region
        // Predicated region
        $region21: #{tpu_custom_call.1} parent=19 // pred_check
          %p145 = pneg %p57
        $region22: #{tpu_custom_call.1} parent=19 // pred_check_branch
          %147 = sbr.rel (%p145) target = $region24
        $region23: #{tpu_custom_call.1} parent=19 // pred_region
          %s148 = sand.u32 %s16, 1
          %s149 = scalar_lea.sflag [#allocation6], %s148
          %s150 = sand.u32 %s47, 1
          %s151 = smul.addr %s150, 4096
          %s152 = scalar_lea.vmem [#allocation5], %s151
          %s153 = smul.u32 4, %s16
          %s155 = ssub.s32 65536, 65536
          %156 = vsyncadd %s149, %s155
          %s157 = smul.addr %s153, 128
          %s158 = scalar_lea.hbm %s1, %s157
          %s159 = sshll.u32 %s152, 4
          %s160 = int_to_ptr.vmem [resolvable:$true] %s159
          %165 = dma.hbm_to_vmem [thread:$0]  %s158, 65536, %s160, %s149, 2048, 512, 32
        $region24: #{tpu_custom_call.1} parent=19 // pred_fallthru
          _
        // Predicated region
        $region25: #{tpu_custom_call.1} parent=19 // pred_check
          %p166 = pneg %p83
        $region26: #{tpu_custom_call.1} parent=19 // pred_check_branch
          %168 = sbr.rel (%p166) target = $region28
        $region27: #{tpu_custom_call.1} parent=19 // pred_region
          %s169 = sand.u32 %s16, 1
          %s170 = scalar_lea.sflag [#allocation6], %s169
          %s171 = sand.u32 %s73, 1
          %s172 = smul.addr %s171, 4
          %s173 = scalar_lea.vmem [#allocation7], %s172
          %s174 = smul.u32 4, %s16
          %s176 = ssub.s32 64, 64
          %177 = vsyncadd %s170, %s176
          %s178 = smul.addr %s174, 16
          %s179 = scalar_lea.hbm %s2, %s178
          %s181 = sshll.u32 %s173, 4
          %s182 = int_to_ptr.vmem [resolvable:$true] %s181
          %184 = dma.hbm_to_vmem [thread:$0]  %s179, 64, %s182, %s170
        $region28: #{tpu_custom_call.1} parent=19 // pred_fallthru
          _
      $region20: #{tpu_custom_call.1} parent=5 // pred_fallthru
        _
      %p185 = scmp.le.s32.totalorder 1, %s16
      %p186 = scmp.lt.s32.totalorder %s16, 5
      %p187 = pnand %p185, %p186
      %p188 = pneg %p187
      // Predicated region
      $region29: #{tpu_custom_call.1} parent=5 // pred_check
        _
      $region30: #{tpu_custom_call.1} parent=5 // pred_check_branch
        %190 = sbr.rel (%p187) target = $region32
      $region31: #{tpu_custom_call.1} parent=5 // pred_region
        %s191 = ssub.s32 %s16, 1
        // Predicated region
        $region33: #{tpu_custom_call.1} parent=31 // pred_check
          %p192 = pneg %p37
        $region34: #{tpu_custom_call.1} parent=31 // pred_check_branch
          %194 = sbr.rel (%p192) target = $region36
        $region35: #{tpu_custom_call.1} parent=31 // pred_region
          %195 = dma.done [#allocation3], 1024
        $region36: #{tpu_custom_call.1} parent=31 // pred_fallthru
          _
        %s196 = sand.u32 %s21, 1
        %s197 = scalar_lea.sflag [#allocation6], %s196
        %s198 = sand.u32 %s50, 1
        %s199 = smul.addr %s198, 4096
        %s200 = scalar_lea.vmem [#allocation5], %s199
        // Predicated region
        $region37: #{tpu_custom_call.1} parent=31 // pred_check
          %p201 = pneg %p63
        $region38: #{tpu_custom_call.1} parent=31 // pred_check_branch
          %203 = sbr.rel (%p201) target = $region40
        $region39: #{tpu_custom_call.1} parent=31 // pred_region
          %204 = dma.done %s197, 65536
        $region40: #{tpu_custom_call.1} parent=31 // pred_fallthru
          _
        %s205 = sand.u32 %s21, 1
        %s206 = scalar_lea.sflag [#allocation6], %s205
        %s207 = sand.u32 %s76, 1
        %s208 = smul.addr %s207, 4
        %s209 = scalar_lea.vmem [#allocation7], %s208
        // Predicated region
        $region41: #{tpu_custom_call.1} parent=31 // pred_check
          %p210 = pneg %p89
        $region42: #{tpu_custom_call.1} parent=31 // pred_check_branch
          %212 = sbr.rel (%p210) target = $region44
        $region43: #{tpu_custom_call.1} parent=31 // pred_region
          %213 = dma.done %s206, 64
        $region44: #{tpu_custom_call.1} parent=31 // pred_fallthru
          _
        %p214 = pneg %p37
        %p215 = pneg %p34
        %s216 = sand.u32 %s21, 1
        %s217 = scalar_lea.sflag [#allocation6], %s216
        %s218 = sand.u32 %s50, 1
        %s219 = smul.addr %s218, 4096
        %s220 = scalar_lea.vmem [#allocation5], %s219
        %p221 = pneg %p63
        %p222 = pneg %p60
        %s223 = sand.u32 %s21, 1
        %s224 = scalar_lea.sflag [#allocation6], %s223
        %s225 = sand.u32 %s76, 1
        %s226 = smul.addr %s225, 4
        %s227 = scalar_lea.vmem [#allocation7], %s226
        %p228 = pneg %p89
        %p229 = pneg %p86
        %p230 = pneg %p115
        %p231 = pneg %p112
        %s232 = sand.u32 %s102, 1
        %s233 = scalar_lea.sflag [#allocation4], %s232
        %s234 = sand.u32 %s102, 1
        %s235 = smul.addr %s234, 32
        %s236 = scalar_lea.vmem [#allocation8], %s235
        %s237 = smul.u32 4, %s21
        %s238 = smul.u32 4, %s21
        %s239 = smul.u32 4, %s21
        %v240 = vld [vmem:[#allocation2] sm:$0xff]
        %v241 = vld [vmem:[#allocation2 + $0x8] sm:$0xff]
        %v242 = vld [vmem:[#allocation2 + $0x10] sm:$0xff]
        %v243 = vld [vmem:[#allocation2 + $0x18] sm:$0xff]
        %v244 = vld [vmem:[#allocation2 + $0x20] sm:$0xff]
        %v245 = vld [vmem:[#allocation2 + $0x28] sm:$0xff]
        %v246 = vld [vmem:[#allocation2 + $0x30] sm:$0xff]
        %v247 = vld [vmem:[#allocation2 + $0x38] sm:$0xff]
        %v248 = vld [vmem:[%s200] sm:$0xff]
        %v249 = vld [vmem:[%s200 + $0x8] sm:$0xff]
        %v250 = vld [vmem:[%s200 + $0x10] sm:$0xff]
        %v251 = vld [vmem:[%s200 + $0x18] sm:$0xff]
        %v252 = vld [vmem:[%s200 + $0x20] sm:$0xff]
        %v253 = vld [vmem:[%s200 + $0x28] sm:$0xff]
        %v254 = vld [vmem:[%s200 + $0x30] sm:$0xff]
        %v255 = vld [vmem:[%s200 + $0x38] sm:$0xff]
        %v256 = vld [vmem:[%s200 + $0x40] sm:$0xff]
        %v257 = vld [vmem:[%s200 + $0x48] sm:$0xff]
        %v258 = vld [vmem:[%s200 + $0x50] sm:$0xff]
        %v259 = vld [vmem:[%s200 + $0x58] sm:$0xff]
        %v260 = vld [vmem:[%s200 + $0x60] sm:$0xff]
        %v261 = vld [vmem:[%s200 + $0x68] sm:$0xff]
        %v262 = vld [vmem:[%s200 + $0x70] sm:$0xff]
        %v263 = vld [vmem:[%s200 + $0x78] sm:$0xff]
        %v264 = vld [vmem:[%s200 + $0x80] sm:$0xff]
        %v265 = vld [vmem:[%s200 + $0x88] sm:$0xff]
        %v266 = vld [vmem:[%s200 + $0x90] sm:$0xff]
        %v267 = vld [vmem:[%s200 + $0x98] sm:$0xff]
        %v268 = vld [vmem:[%s200 + $0xa0] sm:$0xff]
        %v269 = vld [vmem:[%s200 + $0xa8] sm:$0xff]
        %v270 = vld [vmem:[%s200 + $0xb0] sm:$0xff]
        %v271 = vld [vmem:[%s200 + $0xb8] sm:$0xff]
        %v272 = vld [vmem:[%s200 + $0xc0] sm:$0xff]
        %v273 = vld [vmem:[%s200 + $0xc8] sm:$0xff]
        %v274 = vld [vmem:[%s200 + $0xd0] sm:$0xff]
        %v275 = vld [vmem:[%s200 + $0xd8] sm:$0xff]
        %v276 = vld [vmem:[%s200 + $0xe0] sm:$0xff]
        %v277 = vld [vmem:[%s200 + $0xe8] sm:$0xff]
        %v278 = vld [vmem:[%s200 + $0xf0] sm:$0xff]
        %v279 = vld [vmem:[%s200 + $0xf8] sm:$0xff]
        %v280 = vld [vmem:[%s200 + $0x100] sm:$0xff]
        %v281 = vld [vmem:[%s200 + $0x108] sm:$0xff]
        %v282 = vld [vmem:[%s200 + $0x110] sm:$0xff]
        %v283 = vld [vmem:[%s200 + $0x118] sm:$0xff]
        %v284 = vld [vmem:[%s200 + $0x120] sm:$0xff]
        %v285 = vld [vmem:[%s200 + $0x128] sm:$0xff]
        %v286 = vld [vmem:[%s200 + $0x130] sm:$0xff]
        %v287 = vld [vmem:[%s200 + $0x138] sm:$0xff]
        %v288 = vld [vmem:[%s200 + $0x140] sm:$0xff]
        %v289 = vld [vmem:[%s200 + $0x148] sm:$0xff]
        %v290 = vld [vmem:[%s200 + $0x150] sm:$0xff]
        %v291 = vld [vmem:[%s200 + $0x158] sm:$0xff]
        %v292 = vld [vmem:[%s200 + $0x160] sm:$0xff]
        %v293 = vld [vmem:[%s200 + $0x168] sm:$0xff]
        %v294 = vld [vmem:[%s200 + $0x170] sm:$0xff]
        %v295 = vld [vmem:[%s200 + $0x178] sm:$0xff]
        %v296 = vld [vmem:[%s200 + $0x180] sm:$0xff]
        %v297 = vld [vmem:[%s200 + $0x188] sm:$0xff]
        %v298 = vld [vmem:[%s200 + $0x190] sm:$0xff]
        %v299 = vld [vmem:[%s200 + $0x198] sm:$0xff]
        %v300 = vld [vmem:[%s200 + $0x1a0] sm:$0xff]
        %v301 = vld [vmem:[%s200 + $0x1a8] sm:$0xff]
        %v302 = vld [vmem:[%s200 + $0x1b0] sm:$0xff]
        %v303 = vld [vmem:[%s200 + $0x1b8] sm:$0xff]
        %v304 = vld [vmem:[%s200 + $0x1c0] sm:$0xff]
        %v305 = vld [vmem:[%s200 + $0x1c8] sm:$0xff]
        %v306 = vld [vmem:[%s200 + $0x1d0] sm:$0xff]
        %v307 = vld [vmem:[%s200 + $0x1d8] sm:$0xff]
        %v308 = vld [vmem:[%s200 + $0x1e0] sm:$0xff]
        %v309 = vld [vmem:[%s200 + $0x1e8] sm:$0xff]
        %v310 = vld [vmem:[%s200 + $0x1f0] sm:$0xff]
        %v311 = vld [vmem:[%s200 + $0x1f8] sm:$0xff]
        %v312 = vld [vmem:[%s200 + $0x200] sm:$0xff]
        %v313 = vld [vmem:[%s200 + $0x208] sm:$0xff]
        %v314 = vld [vmem:[%s200 + $0x210] sm:$0xff]
        %v315 = vld [vmem:[%s200 + $0x218] sm:$0xff]
        %v316 = vld [vmem:[%s200 + $0x220] sm:$0xff]
        %v317 = vld [vmem:[%s200 + $0x228] sm:$0xff]
        %v318 = vld [vmem:[%s200 + $0x230] sm:$0xff]
        %v319 = vld [vmem:[%s200 + $0x238] sm:$0xff]
        %v320 = vld [vmem:[%s200 + $0x240] sm:$0xff]
        %v321 = vld [vmem:[%s200 + $0x248] sm:$0xff]
        %v322 = vld [vmem:[%s200 + $0x250] sm:$0xff]
        %v323 = vld [vmem:[%s200 + $0x258] sm:$0xff]
        %v324 = vld [vmem:[%s200 + $0x260] sm:$0xff]
        %v325 = vld [vmem:[%s200 + $0x268] sm:$0xff]
        %v326 = vld [vmem:[%s200 + $0x270] sm:$0xff]
        %v327 = vld [vmem:[%s200 + $0x278] sm:$0xff]
        %v328 = vld [vmem:[%s200 + $0x280] sm:$0xff]
        %v329 = vld [vmem:[%s200 + $0x288] sm:$0xff]
        %v330 = vld [vmem:[%s200 + $0x290] sm:$0xff]
        %v331 = vld [vmem:[%s200 + $0x298] sm:$0xff]
        %v332 = vld [vmem:[%s200 + $0x2a0] sm:$0xff]
        %v333 = vld [vmem:[%s200 + $0x2a8] sm:$0xff]
        %v334 = vld [vmem:[%s200 + $0x2b0] sm:$0xff]
        %v335 = vld [vmem:[%s200 + $0x2b8] sm:$0xff]
        %v336 = vld [vmem:[%s200 + $0x2c0] sm:$0xff]
        %v337 = vld [vmem:[%s200 + $0x2c8] sm:$0xff]
        %v338 = vld [vmem:[%s200 + $0x2d0] sm:$0xff]
        %v339 = vld [vmem:[%s200 + $0x2d8] sm:$0xff]
        %v340 = vld [vmem:[%s200 + $0x2e0] sm:$0xff]
        %v341 = vld [vmem:[%s200 + $0x2e8] sm:$0xff]
        %v342 = vld [vmem:[%s200 + $0x2f0] sm:$0xff]
        %v343 = vld [vmem:[%s200 + $0x2f8] sm:$0xff]
        %v344 = vld [vmem:[%s200 + $0x300] sm:$0xff]
        %v345 = vld [vmem:[%s200 + $0x308] sm:$0xff]
        %v346 = vld [vmem:[%s200 + $0x310] sm:$0xff]
        %v347 = vld [vmem:[%s200 + $0x318] sm:$0xff]
        %v348 = vld [vmem:[%s200 + $0x320] sm:$0xff]
        %v349 = vld [vmem:[%s200 + $0x328] sm:$0xff]
        %v350 = vld [vmem:[%s200 + $0x330] sm:$0xff]
        %v351 = vld [vmem:[%s200 + $0x338] sm:$0xff]
        %v352 = vld [vmem:[%s200 + $0x340] sm:$0xff]
        %v353 = vld [vmem:[%s200 + $0x348] sm:$0xff]
        %v354 = vld [vmem:[%s200 + $0x350] sm:$0xff]
        %v355 = vld [vmem:[%s200 + $0x358] sm:$0xff]
        %v356 = vld [vmem:[%s200 + $0x360] sm:$0xff]
        %v357 = vld [vmem:[%s200 + $0x368] sm:$0xff]
        %v358 = vld [vmem:[%s200 + $0x370] sm:$0xff]
        %v359 = vld [vmem:[%s200 + $0x378] sm:$0xff]
        %v360 = vld [vmem:[%s200 + $0x380] sm:$0xff]
        %v361 = vld [vmem:[%s200 + $0x388] sm:$0xff]
        %v362 = vld [vmem:[%s200 + $0x390] sm:$0xff]
        %v363 = vld [vmem:[%s200 + $0x398] sm:$0xff]
        %v364 = vld [vmem:[%s200 + $0x3a0] sm:$0xff]
        %v365 = vld [vmem:[%s200 + $0x3a8] sm:$0xff]
        %v366 = vld [vmem:[%s200 + $0x3b0] sm:$0xff]
        %v367 = vld [vmem:[%s200 + $0x3b8] sm:$0xff]
        %v368 = vld [vmem:[%s200 + $0x3c0] sm:$0xff]
        %v369 = vld [vmem:[%s200 + $0x3c8] sm:$0xff]
        %v370 = vld [vmem:[%s200 + $0x3d0] sm:$0xff]
        %v371 = vld [vmem:[%s200 + $0x3d8] sm:$0xff]
        %v372 = vld [vmem:[%s200 + $0x3e0] sm:$0xff]
        %v373 = vld [vmem:[%s200 + $0x3e8] sm:$0xff]
        %v374 = vld [vmem:[%s200 + $0x3f0] sm:$0xff]
        %v375 = vld [vmem:[%s200 + $0x3f8] sm:$0xff]
        %v376 = vld [vmem:[%s200 + $0x400] sm:$0xff]
        %v377 = vld [vmem:[%s200 + $0x408] sm:$0xff]
        %v378 = vld [vmem:[%s200 + $0x410] sm:$0xff]
        %v379 = vld [vmem:[%s200 + $0x418] sm:$0xff]
        %v380 = vld [vmem:[%s200 + $0x420] sm:$0xff]
        %v381 = vld [vmem:[%s200 + $0x428] sm:$0xff]
        %v382 = vld [vmem:[%s200 + $0x430] sm:$0xff]
        %v383 = vld [vmem:[%s200 + $0x438] sm:$0xff]
        %v384 = vld [vmem:[%s200 + $0x440] sm:$0xff]
        %v385 = vld [vmem:[%s200 + $0x448] sm:$0xff]
        %v386 = vld [vmem:[%s200 + $0x450] sm:$0xff]
        %v387 = vld [vmem:[%s200 + $0x458] sm:$0xff]
        %v388 = vld [vmem:[%s200 + $0x460] sm:$0xff]
        %v389 = vld [vmem:[%s200 + $0x468] sm:$0xff]
        %v390 = vld [vmem:[%s200 + $0x470] sm:$0xff]
        %v391 = vld [vmem:[%s200 + $0x478] sm:$0xff]
        %v392 = vld [vmem:[%s200 + $0x480] sm:$0xff]
        %v393 = vld [vmem:[%s200 + $0x488] sm:$0xff]
        %v394 = vld [vmem:[%s200 + $0x490] sm:$0xff]
        %v395 = vld [vmem:[%s200 + $0x498] sm:$0xff]
        %v396 = vld [vmem:[%s200 + $0x4a0] sm:$0xff]
        %v397 = vld [vmem:[%s200 + $0x4a8] sm:$0xff]
        %v398 = vld [vmem:[%s200 + $0x4b0] sm:$0xff]
        %v399 = vld [vmem:[%s200 + $0x4b8] sm:$0xff]
        %v400 = vld [vmem:[%s200 + $0x4c0] sm:$0xff]
        %v401 = vld [vmem:[%s200 + $0x4c8] sm:$0xff]
        %v402 = vld [vmem:[%s200 + $0x4d0] sm:$0xff]
        %v403 = vld [vmem:[%s200 + $0x4d8] sm:$0xff]
        %v404 = vld [vmem:[%s200 + $0x4e0] sm:$0xff]
        %v405 = vld [vmem:[%s200 + $0x4e8] sm:$0xff]
        %v406 = vld [vmem:[%s200 + $0x4f0] sm:$0xff]
        %v407 = vld [vmem:[%s200 + $0x4f8] sm:$0xff]
        %v408 = vld [vmem:[%s200 + $0x500] sm:$0xff]
        %v409 = vld [vmem:[%s200 + $0x508] sm:$0xff]
        %v410 = vld [vmem:[%s200 + $0x510] sm:$0xff]
        %v411 = vld [vmem:[%s200 + $0x518] sm:$0xff]
        %v412 = vld [vmem:[%s200 + $0x520] sm:$0xff]
        %v413 = vld [vmem:[%s200 + $0x528] sm:$0xff]
        %v414 = vld [vmem:[%s200 + $0x530] sm:$0xff]
        %v415 = vld [vmem:[%s200 + $0x538] sm:$0xff]
        %v416 = vld [vmem:[%s200 + $0x540] sm:$0xff]
        %v417 = vld [vmem:[%s200 + $0x548] sm:$0xff]
        %v418 = vld [vmem:[%s200 + $0x550] sm:$0xff]
        %v419 = vld [vmem:[%s200 + $0x558] sm:$0xff]
        %v420 = vld [vmem:[%s200 + $0x560] sm:$0xff]
        %v421 = vld [vmem:[%s200 + $0x568] sm:$0xff]
        %v422 = vld [vmem:[%s200 + $0x570] sm:$0xff]
        %v423 = vld [vmem:[%s200 + $0x578] sm:$0xff]
        %v424 = vld [vmem:[%s200 + $0x580] sm:$0xff]
        %v425 = vld [vmem:[%s200 + $0x588] sm:$0xff]
        %v426 = vld [vmem:[%s200 + $0x590] sm:$0xff]
        %v427 = vld [vmem:[%s200 + $0x598] sm:$0xff]
        %v428 = vld [vmem:[%s200 + $0x5a0] sm:$0xff]
        %v429 = vld [vmem:[%s200 + $0x5a8] sm:$0xff]
        %v430 = vld [vmem:[%s200 + $0x5b0] sm:$0xff]
        %v431 = vld [vmem:[%s200 + $0x5b8] sm:$0xff]
        %v432 = vld [vmem:[%s200 + $0x5c0] sm:$0xff]
        %v433 = vld [vmem:[%s200 + $0x5c8] sm:$0xff]
        %v434 = vld [vmem:[%s200 + $0x5d0] sm:$0xff]
        %v435 = vld [vmem:[%s200 + $0x5d8] sm:$0xff]
        %v436 = vld [vmem:[%s200 + $0x5e0] sm:$0xff]
        %v437 = vld [vmem:[%s200 + $0x5e8] sm:$0xff]
        %v438 = vld [vmem:[%s200 + $0x5f0] sm:$0xff]
        %v439 = vld [vmem:[%s200 + $0x5f8] sm:$0xff]
        %v440 = vld [vmem:[%s200 + $0x600] sm:$0xff]
        %v441 = vld [vmem:[%s200 + $0x608] sm:$0xff]
        %v442 = vld [vmem:[%s200 + $0x610] sm:$0xff]
        %v443 = vld [vmem:[%s200 + $0x618] sm:$0xff]
        %v444 = vld [vmem:[%s200 + $0x620] sm:$0xff]
        %v445 = vld [vmem:[%s200 + $0x628] sm:$0xff]
        %v446 = vld [vmem:[%s200 + $0x630] sm:$0xff]
        %v447 = vld [vmem:[%s200 + $0x638] sm:$0xff]
        %v448 = vld [vmem:[%s200 + $0x640] sm:$0xff]
        %v449 = vld [vmem:[%s200 + $0x648] sm:$0xff]
        %v450 = vld [vmem:[%s200 + $0x650] sm:$0xff]
        %v451 = vld [vmem:[%s200 + $0x658] sm:$0xff]
        %v452 = vld [vmem:[%s200 + $0x660] sm:$0xff]
        %v453 = vld [vmem:[%s200 + $0x668] sm:$0xff]
        %v454 = vld [vmem:[%s200 + $0x670] sm:$0xff]
        %v455 = vld [vmem:[%s200 + $0x678] sm:$0xff]
        %v456 = vld [vmem:[%s200 + $0x680] sm:$0xff]
        %v457 = vld [vmem:[%s200 + $0x688] sm:$0xff]
        %v458 = vld [vmem:[%s200 + $0x690] sm:$0xff]
        %v459 = vld [vmem:[%s200 + $0x698] sm:$0xff]
        %v460 = vld [vmem:[%s200 + $0x6a0] sm:$0xff]
        %v461 = vld [vmem:[%s200 + $0x6a8] sm:$0xff]
        %v462 = vld [vmem:[%s200 + $0x6b0] sm:$0xff]
        %v463 = vld [vmem:[%s200 + $0x6b8] sm:$0xff]
        %v464 = vld [vmem:[%s200 + $0x6c0] sm:$0xff]
        %v465 = vld [vmem:[%s200 + $0x6c8] sm:$0xff]
        %v466 = vld [vmem:[%s200 + $0x6d0] sm:$0xff]
        %v467 = vld [vmem:[%s200 + $0x6d8] sm:$0xff]
        %v468 = vld [vmem:[%s200 + $0x6e0] sm:$0xff]
        %v469 = vld [vmem:[%s200 + $0x6e8] sm:$0xff]
        %v470 = vld [vmem:[%s200 + $0x6f0] sm:$0xff]
        %v471 = vld [vmem:[%s200 + $0x6f8] sm:$0xff]
        %v472 = vld [vmem:[%s200 + $0x700] sm:$0xff]
        %v473 = vld [vmem:[%s200 + $0x708] sm:$0xff]
        %v474 = vld [vmem:[%s200 + $0x710] sm:$0xff]
        %v475 = vld [vmem:[%s200 + $0x718] sm:$0xff]
        %v476 = vld [vmem:[%s200 + $0x720] sm:$0xff]
        %v477 = vld [vmem:[%s200 + $0x728] sm:$0xff]
        %v478 = vld [vmem:[%s200 + $0x730] sm:$0xff]
        %v479 = vld [vmem:[%s200 + $0x738] sm:$0xff]
        %v480 = vld [vmem:[%s200 + $0x740] sm:$0xff]
        %v481 = vld [vmem:[%s200 + $0x748] sm:$0xff]
        %v482 = vld [vmem:[%s200 + $0x750] sm:$0xff]
        %v483 = vld [vmem:[%s200 + $0x758] sm:$0xff]
        %v484 = vld [vmem:[%s200 + $0x760] sm:$0xff]
        %v485 = vld [vmem:[%s200 + $0x768] sm:$0xff]
        %v486 = vld [vmem:[%s200 + $0x770] sm:$0xff]
        %v487 = vld [vmem:[%s200 + $0x778] sm:$0xff]
        %v488 = vld [vmem:[%s200 + $0x780] sm:$0xff]
        %v489 = vld [vmem:[%s200 + $0x788] sm:$0xff]
        %v490 = vld [vmem:[%s200 + $0x790] sm:$0xff]
        %v491 = vld [vmem:[%s200 + $0x798] sm:$0xff]
        %v492 = vld [vmem:[%s200 + $0x7a0] sm:$0xff]
        %v493 = vld [vmem:[%s200 + $0x7a8] sm:$0xff]
        %v494 = vld [vmem:[%s200 + $0x7b0] sm:$0xff]
        %v495 = vld [vmem:[%s200 + $0x7b8] sm:$0xff]
        %v496 = vld [vmem:[%s200 + $0x7c0] sm:$0xff]
        %v497 = vld [vmem:[%s200 + $0x7c8] sm:$0xff]
        %v498 = vld [vmem:[%s200 + $0x7d0] sm:$0xff]
        %v499 = vld [vmem:[%s200 + $0x7d8] sm:$0xff]
        %v500 = vld [vmem:[%s200 + $0x7e0] sm:$0xff]
        %v501 = vld [vmem:[%s200 + $0x7e8] sm:$0xff]
        %v502 = vld [vmem:[%s200 + $0x7f0] sm:$0xff]
        %v503 = vld [vmem:[%s200 + $0x7f8] sm:$0xff]
        %v504 = vld [vmem:[%s200 + $0x800] sm:$0xff]
        %v505 = vld [vmem:[%s200 + $0x808] sm:$0xff]
        %v506 = vld [vmem:[%s200 + $0x810] sm:$0xff]
        %v507 = vld [vmem:[%s200 + $0x818] sm:$0xff]
        %v508 = vld [vmem:[%s200 + $0x820] sm:$0xff]
        %v509 = vld [vmem:[%s200 + $0x828] sm:$0xff]
        %v510 = vld [vmem:[%s200 + $0x830] sm:$0xff]
        %v511 = vld [vmem:[%s200 + $0x838] sm:$0xff]
        %v512 = vld [vmem:[%s200 + $0x840] sm:$0xff]
        %v513 = vld [vmem:[%s200 + $0x848] sm:$0xff]
        %v514 = vld [vmem:[%s200 + $0x850] sm:$0xff]
        %v515 = vld [vmem:[%s200 + $0x858] sm:$0xff]
        %v516 = vld [vmem:[%s200 + $0x860] sm:$0xff]
        %v517 = vld [vmem:[%s200 + $0x868] sm:$0xff]
        %v518 = vld [vmem:[%s200 + $0x870] sm:$0xff]
        %v519 = vld [vmem:[%s200 + $0x878] sm:$0xff]
        %v520 = vld [vmem:[%s200 + $0x880] sm:$0xff]
        %v521 = vld [vmem:[%s200 + $0x888] sm:$0xff]
        %v522 = vld [vmem:[%s200 + $0x890] sm:$0xff]
        %v523 = vld [vmem:[%s200 + $0x898] sm:$0xff]
        %v524 = vld [vmem:[%s200 + $0x8a0] sm:$0xff]
        %v525 = vld [vmem:[%s200 + $0x8a8] sm:$0xff]
        %v526 = vld [vmem:[%s200 + $0x8b0] sm:$0xff]
        %v527 = vld [vmem:[%s200 + $0x8b8] sm:$0xff]
        %v528 = vld [vmem:[%s200 + $0x8c0] sm:$0xff]
        %v529 = vld [vmem:[%s200 + $0x8c8] sm:$0xff]
        %v530 = vld [vmem:[%s200 + $0x8d0] sm:$0xff]
        %v531 = vld [vmem:[%s200 + $0x8d8] sm:$0xff]
        %v532 = vld [vmem:[%s200 + $0x8e0] sm:$0xff]
        %v533 = vld [vmem:[%s200 + $0x8e8] sm:$0xff]
        %v534 = vld [vmem:[%s200 + $0x8f0] sm:$0xff]
        %v535 = vld [vmem:[%s200 + $0x8f8] sm:$0xff]
        %v536 = vld [vmem:[%s200 + $0x900] sm:$0xff]
        %v537 = vld [vmem:[%s200 + $0x908] sm:$0xff]
        %v538 = vld [vmem:[%s200 + $0x910] sm:$0xff]
        %v539 = vld [vmem:[%s200 + $0x918] sm:$0xff]
        %v540 = vld [vmem:[%s200 + $0x920] sm:$0xff]
        %v541 = vld [vmem:[%s200 + $0x928] sm:$0xff]
        %v542 = vld [vmem:[%s200 + $0x930] sm:$0xff]
        %v543 = vld [vmem:[%s200 + $0x938] sm:$0xff]
        %v544 = vld [vmem:[%s200 + $0x940] sm:$0xff]
        %v545 = vld [vmem:[%s200 + $0x948] sm:$0xff]
        %v546 = vld [vmem:[%s200 + $0x950] sm:$0xff]
        %v547 = vld [vmem:[%s200 + $0x958] sm:$0xff]
        %v548 = vld [vmem:[%s200 + $0x960] sm:$0xff]
        %v549 = vld [vmem:[%s200 + $0x968] sm:$0xff]
        %v550 = vld [vmem:[%s200 + $0x970] sm:$0xff]
        %v551 = vld [vmem:[%s200 + $0x978] sm:$0xff]
        %v552 = vld [vmem:[%s200 + $0x980] sm:$0xff]
        %v553 = vld [vmem:[%s200 + $0x988] sm:$0xff]
        %v554 = vld [vmem:[%s200 + $0x990] sm:$0xff]
        %v555 = vld [vmem:[%s200 + $0x998] sm:$0xff]
        %v556 = vld [vmem:[%s200 + $0x9a0] sm:$0xff]
        %v557 = vld [vmem:[%s200 + $0x9a8] sm:$0xff]
        %v558 = vld [vmem:[%s200 + $0x9b0] sm:$0xff]
        %v559 = vld [vmem:[%s200 + $0x9b8] sm:$0xff]
        %v560 = vld [vmem:[%s200 + $0x9c0] sm:$0xff]
        %v561 = vld [vmem:[%s200 + $0x9c8] sm:$0xff]
        %v562 = vld [vmem:[%s200 + $0x9d0] sm:$0xff]
        %v563 = vld [vmem:[%s200 + $0x9d8] sm:$0xff]
        %v564 = vld [vmem:[%s200 + $0x9e0] sm:$0xff]
        %v565 = vld [vmem:[%s200 + $0x9e8] sm:$0xff]
        %v566 = vld [vmem:[%s200 + $0x9f0] sm:$0xff]
        %v567 = vld [vmem:[%s200 + $0x9f8] sm:$0xff]
        %v568 = vld [vmem:[%s200 + $0xa00] sm:$0xff]
        %v569 = vld [vmem:[%s200 + $0xa08] sm:$0xff]
        %v570 = vld [vmem:[%s200 + $0xa10] sm:$0xff]
        %v571 = vld [vmem:[%s200 + $0xa18] sm:$0xff]
        %v572 = vld [vmem:[%s200 + $0xa20] sm:$0xff]
        %v573 = vld [vmem:[%s200 + $0xa28] sm:$0xff]
        %v574 = vld [vmem:[%s200 + $0xa30] sm:$0xff]
        %v575 = vld [vmem:[%s200 + $0xa38] sm:$0xff]
        %v576 = vld [vmem:[%s200 + $0xa40] sm:$0xff]
        %v577 = vld [vmem:[%s200 + $0xa48] sm:$0xff]
        %v578 = vld [vmem:[%s200 + $0xa50] sm:$0xff]
        %v579 = vld [vmem:[%s200 + $0xa58] sm:$0xff]
        %v580 = vld [vmem:[%s200 + $0xa60] sm:$0xff]
        %v581 = vld [vmem:[%s200 + $0xa68] sm:$0xff]
        %v582 = vld [vmem:[%s200 + $0xa70] sm:$0xff]
        %v583 = vld [vmem:[%s200 + $0xa78] sm:$0xff]
        %v584 = vld [vmem:[%s200 + $0xa80] sm:$0xff]
        %v585 = vld [vmem:[%s200 + $0xa88] sm:$0xff]
        %v586 = vld [vmem:[%s200 + $0xa90] sm:$0xff]
        %v587 = vld [vmem:[%s200 + $0xa98] sm:$0xff]
        %v588 = vld [vmem:[%s200 + $0xaa0] sm:$0xff]
        %v589 = vld [vmem:[%s200 + $0xaa8] sm:$0xff]
        %v590 = vld [vmem:[%s200 + $0xab0] sm:$0xff]
        %v591 = vld [vmem:[%s200 + $0xab8] sm:$0xff]
        %v592 = vld [vmem:[%s200 + $0xac0] sm:$0xff]
        %v593 = vld [vmem:[%s200 + $0xac8] sm:$0xff]
        %v594 = vld [vmem:[%s200 + $0xad0] sm:$0xff]
        %v595 = vld [vmem:[%s200 + $0xad8] sm:$0xff]
        %v596 = vld [vmem:[%s200 + $0xae0] sm:$0xff]
        %v597 = vld [vmem:[%s200 + $0xae8] sm:$0xff]
        %v598 = vld [vmem:[%s200 + $0xaf0] sm:$0xff]
        %v599 = vld [vmem:[%s200 + $0xaf8] sm:$0xff]
        %v600 = vld [vmem:[%s200 + $0xb00] sm:$0xff]
        %v601 = vld [vmem:[%s200 + $0xb08] sm:$0xff]
        %v602 = vld [vmem:[%s200 + $0xb10] sm:$0xff]
        %v603 = vld [vmem:[%s200 + $0xb18] sm:$0xff]
        %v604 = vld [vmem:[%s200 + $0xb20] sm:$0xff]
        %v605 = vld [vmem:[%s200 + $0xb28] sm:$0xff]
        %v606 = vld [vmem:[%s200 + $0xb30] sm:$0xff]
        %v607 = vld [vmem:[%s200 + $0xb38] sm:$0xff]
        %v608 = vld [vmem:[%s200 + $0xb40] sm:$0xff]
        %v609 = vld [vmem:[%s200 + $0xb48] sm:$0xff]
        %v610 = vld [vmem:[%s200 + $0xb50] sm:$0xff]
        %v611 = vld [vmem:[%s200 + $0xb58] sm:$0xff]
        %v612 = vld [vmem:[%s200 + $0xb60] sm:$0xff]
        %v613 = vld [vmem:[%s200 + $0xb68] sm:$0xff]
        %v614 = vld [vmem:[%s200 + $0xb70] sm:$0xff]
        %v615 = vld [vmem:[%s200 + $0xb78] sm:$0xff]
        %v616 = vld [vmem:[%s200 + $0xb80] sm:$0xff]
        %v617 = vld [vmem:[%s200 + $0xb88] sm:$0xff]
        %v618 = vld [vmem:[%s200 + $0xb90] sm:$0xff]
        %v619 = vld [vmem:[%s200 + $0xb98] sm:$0xff]
        %v620 = vld [vmem:[%s200 + $0xba0] sm:$0xff]
        %v621 = vld [vmem:[%s200 + $0xba8] sm:$0xff]
        %v622 = vld [vmem:[%s200 + $0xbb0] sm:$0xff]
        %v623 = vld [vmem:[%s200 + $0xbb8] sm:$0xff]
        %v624 = vld [vmem:[%s200 + $0xbc0] sm:$0xff]
        %v625 = vld [vmem:[%s200 + $0xbc8] sm:$0xff]
        %v626 = vld [vmem:[%s200 + $0xbd0] sm:$0xff]
        %v627 = vld [vmem:[%s200 + $0xbd8] sm:$0xff]
        %v628 = vld [vmem:[%s200 + $0xbe0] sm:$0xff]
        %v629 = vld [vmem:[%s200 + $0xbe8] sm:$0xff]
        %v630 = vld [vmem:[%s200 + $0xbf0] sm:$0xff]
        %v631 = vld [vmem:[%s200 + $0xbf8] sm:$0xff]
        %v632 = vld [vmem:[%s200 + $0xc00] sm:$0xff]
        %v633 = vld [vmem:[%s200 + $0xc08] sm:$0xff]
        %v634 = vld [vmem:[%s200 + $0xc10] sm:$0xff]
        %v635 = vld [vmem:[%s200 + $0xc18] sm:$0xff]
        %v636 = vld [vmem:[%s200 + $0xc20] sm:$0xff]
        %v637 = vld [vmem:[%s200 + $0xc28] sm:$0xff]
        %v638 = vld [vmem:[%s200 + $0xc30] sm:$0xff]
        %v639 = vld [vmem:[%s200 + $0xc38] sm:$0xff]
        %v640 = vld [vmem:[%s200 + $0xc40] sm:$0xff]
        %v641 = vld [vmem:[%s200 + $0xc48] sm:$0xff]
        %v642 = vld [vmem:[%s200 + $0xc50] sm:$0xff]
        %v643 = vld [vmem:[%s200 + $0xc58] sm:$0xff]
        %v644 = vld [vmem:[%s200 + $0xc60] sm:$0xff]
        %v645 = vld [vmem:[%s200 + $0xc68] sm:$0xff]
        %v646 = vld [vmem:[%s200 + $0xc70] sm:$0xff]
        %v647 = vld [vmem:[%s200 + $0xc78] sm:$0xff]
        %v648 = vld [vmem:[%s200 + $0xc80] sm:$0xff]
        %v649 = vld [vmem:[%s200 + $0xc88] sm:$0xff]
        %v650 = vld [vmem:[%s200 + $0xc90] sm:$0xff]
        %v651 = vld [vmem:[%s200 + $0xc98] sm:$0xff]
        %v652 = vld [vmem:[%s200 + $0xca0] sm:$0xff]
        %v653 = vld [vmem:[%s200 + $0xca8] sm:$0xff]
        %v654 = vld [vmem:[%s200 + $0xcb0] sm:$0xff]
        %v655 = vld [vmem:[%s200 + $0xcb8] sm:$0xff]
        %v656 = vld [vmem:[%s200 + $0xcc0] sm:$0xff]
        %v657 = vld [vmem:[%s200 + $0xcc8] sm:$0xff]
        %v658 = vld [vmem:[%s200 + $0xcd0] sm:$0xff]
        %v659 = vld [vmem:[%s200 + $0xcd8] sm:$0xff]
        %v660 = vld [vmem:[%s200 + $0xce0] sm:$0xff]
        %v661 = vld [vmem:[%s200 + $0xce8] sm:$0xff]
        %v662 = vld [vmem:[%s200 + $0xcf0] sm:$0xff]
        %v663 = vld [vmem:[%s200 + $0xcf8] sm:$0xff]
        %v664 = vld [vmem:[%s200 + $0xd00] sm:$0xff]
        %v665 = vld [vmem:[%s200 + $0xd08] sm:$0xff]
        %v666 = vld [vmem:[%s200 + $0xd10] sm:$0xff]
        %v667 = vld [vmem:[%s200 + $0xd18] sm:$0xff]
        %v668 = vld [vmem:[%s200 + $0xd20] sm:$0xff]
        %v669 = vld [vmem:[%s200 + $0xd28] sm:$0xff]
        %v670 = vld [vmem:[%s200 + $0xd30] sm:$0xff]
        %v671 = vld [vmem:[%s200 + $0xd38] sm:$0xff]
        %v672 = vld [vmem:[%s200 + $0xd40] sm:$0xff]
        %v673 = vld [vmem:[%s200 + $0xd48] sm:$0xff]
        %v674 = vld [vmem:[%s200 + $0xd50] sm:$0xff]
        %v675 = vld [vmem:[%s200 + $0xd58] sm:$0xff]
        %v676 = vld [vmem:[%s200 + $0xd60] sm:$0xff]
        %v677 = vld [vmem:[%s200 + $0xd68] sm:$0xff]
        %v678 = vld [vmem:[%s200 + $0xd70] sm:$0xff]
        %v679 = vld [vmem:[%s200 + $0xd78] sm:$0xff]
        %v680 = vld [vmem:[%s200 + $0xd80] sm:$0xff]
        %v681 = vld [vmem:[%s200 + $0xd88] sm:$0xff]
        %v682 = vld [vmem:[%s200 + $0xd90] sm:$0xff]
        %v683 = vld [vmem:[%s200 + $0xd98] sm:$0xff]
        %v684 = vld [vmem:[%s200 + $0xda0] sm:$0xff]
        %v685 = vld [vmem:[%s200 + $0xda8] sm:$0xff]
        %v686 = vld [vmem:[%s200 + $0xdb0] sm:$0xff]
        %v687 = vld [vmem:[%s200 + $0xdb8] sm:$0xff]
        %v688 = vld [vmem:[%s200 + $0xdc0] sm:$0xff]
        %v689 = vld [vmem:[%s200 + $0xdc8] sm:$0xff]
        %v690 = vld [vmem:[%s200 + $0xdd0] sm:$0xff]
        %v691 = vld [vmem:[%s200 + $0xdd8] sm:$0xff]
        %v692 = vld [vmem:[%s200 + $0xde0] sm:$0xff]
        %v693 = vld [vmem:[%s200 + $0xde8] sm:$0xff]
        %v694 = vld [vmem:[%s200 + $0xdf0] sm:$0xff]
        %v695 = vld [vmem:[%s200 + $0xdf8] sm:$0xff]
        %v696 = vld [vmem:[%s200 + $0xe00] sm:$0xff]
        %v697 = vld [vmem:[%s200 + $0xe08] sm:$0xff]
        %v698 = vld [vmem:[%s200 + $0xe10] sm:$0xff]
        %v699 = vld [vmem:[%s200 + $0xe18] sm:$0xff]
        %v700 = vld [vmem:[%s200 + $0xe20] sm:$0xff]
        %v701 = vld [vmem:[%s200 + $0xe28] sm:$0xff]
        %v702 = vld [vmem:[%s200 + $0xe30] sm:$0xff]
        %v703 = vld [vmem:[%s200 + $0xe38] sm:$0xff]
        %v704 = vld [vmem:[%s200 + $0xe40] sm:$0xff]
        %v705 = vld [vmem:[%s200 + $0xe48] sm:$0xff]
        %v706 = vld [vmem:[%s200 + $0xe50] sm:$0xff]
        %v707 = vld [vmem:[%s200 + $0xe58] sm:$0xff]
        %v708 = vld [vmem:[%s200 + $0xe60] sm:$0xff]
        %v709 = vld [vmem:[%s200 + $0xe68] sm:$0xff]
        %v710 = vld [vmem:[%s200 + $0xe70] sm:$0xff]
        %v711 = vld [vmem:[%s200 + $0xe78] sm:$0xff]
        %v712 = vld [vmem:[%s200 + $0xe80] sm:$0xff]
        %v713 = vld [vmem:[%s200 + $0xe88] sm:$0xff]
        %v714 = vld [vmem:[%s200 + $0xe90] sm:$0xff]
        %v715 = vld [vmem:[%s200 + $0xe98] sm:$0xff]
        %v716 = vld [vmem:[%s200 + $0xea0] sm:$0xff]
        %v717 = vld [vmem:[%s200 + $0xea8] sm:$0xff]
        %v718 = vld [vmem:[%s200 + $0xeb0] sm:$0xff]
        %v719 = vld [vmem:[%s200 + $0xeb8] sm:$0xff]
        %v720 = vld [vmem:[%s200 + $0xec0] sm:$0xff]
        %v721 = vld [vmem:[%s200 + $0xec8] sm:$0xff]
        %v722 = vld [vmem:[%s200 + $0xed0] sm:$0xff]
        %v723 = vld [vmem:[%s200 + $0xed8] sm:$0xff]
        %v724 = vld [vmem:[%s200 + $0xee0] sm:$0xff]
        %v725 = vld [vmem:[%s200 + $0xee8] sm:$0xff]
        %v726 = vld [vmem:[%s200 + $0xef0] sm:$0xff]
        %v727 = vld [vmem:[%s200 + $0xef8] sm:$0xff]
        %v728 = vld [vmem:[%s200 + $0xf00] sm:$0xff]
        %v729 = vld [vmem:[%s200 + $0xf08] sm:$0xff]
        %v730 = vld [vmem:[%s200 + $0xf10] sm:$0xff]
        %v731 = vld [vmem:[%s200 + $0xf18] sm:$0xff]
        %v732 = vld [vmem:[%s200 + $0xf20] sm:$0xff]
        %v733 = vld [vmem:[%s200 + $0xf28] sm:$0xff]
        %v734 = vld [vmem:[%s200 + $0xf30] sm:$0xff]
        %v735 = vld [vmem:[%s200 + $0xf38] sm:$0xff]
        %v736 = vld [vmem:[%s200 + $0xf40] sm:$0xff]
        %v737 = vld [vmem:[%s200 + $0xf48] sm:$0xff]
        %v738 = vld [vmem:[%s200 + $0xf50] sm:$0xff]
        %v739 = vld [vmem:[%s200 + $0xf58] sm:$0xff]
        %v740 = vld [vmem:[%s200 + $0xf60] sm:$0xff]
        %v741 = vld [vmem:[%s200 + $0xf68] sm:$0xff]
        %v742 = vld [vmem:[%s200 + $0xf70] sm:$0xff]
        %v743 = vld [vmem:[%s200 + $0xf78] sm:$0xff]
        %v744 = vld [vmem:[%s200 + $0xf80] sm:$0xff]
        %v745 = vld [vmem:[%s200 + $0xf88] sm:$0xff]
        %v746 = vld [vmem:[%s200 + $0xf90] sm:$0xff]
        %v747 = vld [vmem:[%s200 + $0xf98] sm:$0xff]
        %v748 = vld [vmem:[%s200 + $0xfa0] sm:$0xff]
        %v749 = vld [vmem:[%s200 + $0xfa8] sm:$0xff]
        %v750 = vld [vmem:[%s200 + $0xfb0] sm:$0xff]
        %v751 = vld [vmem:[%s200 + $0xfb8] sm:$0xff]
        %v752 = vld [vmem:[%s200 + $0xfc0] sm:$0xff]
        %v753 = vld [vmem:[%s200 + $0xfc8] sm:$0xff]
        %v754 = vld [vmem:[%s200 + $0xfd0] sm:$0xff]
        %v755 = vld [vmem:[%s200 + $0xfd8] sm:$0xff]
        %v756 = vld [vmem:[%s200 + $0xfe0] sm:$0xff]
        %v757 = vld [vmem:[%s200 + $0xfe8] sm:$0xff]
        %v758 = vld [vmem:[%s200 + $0xff0] sm:$0xff]
        %v759 = vld [vmem:[%s200 + $0xff8] sm:$0xff]
        %v760 = vld [vmem:[%s209] sm:$0xf]
        %v762 = vlaneseq
        %v763 = vshrl.u32 %v762, 7
        %v764 = vsub.s32 0, %v763
        %v765 = vrot.slane %v760, %v764
        %v766 = vlaneseq
        %v767 = vshrl.u32 %v766, 7
        %v768 = vsub.s32 1, %v767
        %v769 = vrot.slane %v760, %v768
        %v770 = vlaneseq
        %v771 = vshrl.u32 %v770, 7
        %v772 = vsub.s32 2, %v771
        %v773 = vrot.slane %v760, %v772
        %v774 = vlaneseq
        %v775 = vshrl.u32 %v774, 7
        %v776 = vsub.s32 3, %v775
        %v777 = vrot.slane %v760, %v776
        %782 = vmatprep.subr.mxu0 %v309
        %783 = vmatpush1.msra.mxu0 %v308
        %784 = vmatprep.subr.mxu0 %v305
        %785 = vmatpush1.msra.mxu0 %v304
        %786 = vmatprep.subr.mxu0 %v301
        %787 = vmatpush1.msra.mxu0 %v300
        %788 = vmatprep.subr.mxu0 %v297
        %789 = vmatpush1.msra.mxu0 %v296
        %790 = vmatprep.subr.mxu0 %v293
        %791 = vmatpush1.msra.mxu0 %v292
        %792 = vmatprep.subr.mxu0 %v289
        %793 = vmatpush1.msra.mxu0 %v288
        %794 = vmatprep.subr.mxu0 %v285
        %795 = vmatpush1.msra.mxu0 %v284
        %796 = vmatprep.subr.mxu0 %v281
        %797 = vmatpush1.msra.mxu0 %v280
        %798 = vmatprep.subr.mxu0 %v277
        %799 = vmatpush1.msra.mxu0 %v276
        %800 = vmatprep.subr.mxu0 %v273
        %801 = vmatpush1.msra.mxu0 %v272
        %802 = vmatprep.subr.mxu0 %v269
        %803 = vmatpush1.msra.mxu0 %v268
        %804 = vmatprep.subr.mxu0 %v265
        %805 = vmatpush1.msra.mxu0 %v264
        %806 = vmatprep.subr.mxu0 %v261
        %807 = vmatpush1.msra.mxu0 %v260
        %808 = vmatprep.subr.mxu0 %v257
        %809 = vmatpush1.msra.mxu0 %v256
        %810 = vmatprep.subr.mxu0 %v253
        %811 = vmatpush1.msra.mxu0 %v252
        %812 = vmatprep.subr.mxu0 %v249
        %813 = vmatpush1.msra.mxu0 %v248
        %814 = vmatprep.subr.mxu0 %v373
        %815 = vmatpush2.msra.mxu0 %v372
        %816 = vmatprep.subr.mxu0 %v369
        %817 = vmatpush2.msra.mxu0 %v368
        %818 = vmatprep.subr.mxu0 %v365
        %819 = vmatpush2.msra.mxu0 %v364
        %820 = vmatprep.subr.mxu0 %v361
        %821 = vmatpush2.msra.mxu0 %v360
        %822 = vmatprep.subr.mxu0 %v357
        %823 = vmatpush2.msra.mxu0 %v356
        %824 = vmatprep.subr.mxu0 %v353
        %825 = vmatpush2.msra.mxu0 %v352
        %826 = vmatprep.subr.mxu0 %v349
        %827 = vmatpush2.msra.mxu0 %v348
        %828 = vmatprep.subr.mxu0 %v345
        %829 = vmatpush2.msra.mxu0 %v344
        %830 = vmatprep.subr.mxu0 %v341
        %831 = vmatpush2.msra.mxu0 %v340
        %832 = vmatprep.subr.mxu0 %v337
        %833 = vmatpush2.msra.mxu0 %v336
        %834 = vmatprep.subr.mxu0 %v333
        %835 = vmatpush2.msra.mxu0 %v332
        %836 = vmatprep.subr.mxu0 %v329
        %837 = vmatpush2.msra.mxu0 %v328
        %838 = vmatprep.subr.mxu0 %v325
        %839 = vmatpush2.msra.mxu0 %v324
        %840 = vmatprep.subr.mxu0 %v321
        %841 = vmatpush2.msra.mxu0 %v320
        %842 = vmatprep.subr.mxu0 %v317
        %843 = vmatpush2.msra.mxu0 %v316
        %844 = vmatprep.subr.mxu0 %v313
        %845 = vmatpush2.msra.mxu0 %v312
        %846 = vmatprep.mubr.f32.mxu0 %v241
        %847 = vmatmul.mubr.f32.gmra.mxu0 %v240
        %v848 = vpop.f32.mrf.mxu0
        %v849 = vadd.f32 %v765, %v848
        %v850 = vpop.f32.mrf.mxu0
        %v851 = vadd.f32 %v769, %v850
        %852 = vdwg.mxu0
        %853 = vmatprep.subr.mxu0 %v437
        %854 = vmatpush1.msra.mxu0 %v436
        %855 = vmatprep.subr.mxu0 %v433
        %856 = vmatpush1.msra.mxu0 %v432
        %857 = vmatprep.subr.mxu0 %v429
        %858 = vmatpush1.msra.mxu0 %v428
        %859 = vmatprep.subr.mxu0 %v425
        %860 = vmatpush1.msra.mxu0 %v424
        %861 = vmatprep.subr.mxu0 %v421
        %862 = vmatpush1.msra.mxu0 %v420
        %863 = vmatprep.subr.mxu0 %v417
        %864 = vmatpush1.msra.mxu0 %v416
        %865 = vmatprep.subr.mxu0 %v413
        %866 = vmatpush1.msra.mxu0 %v412
        %867 = vmatprep.subr.mxu0 %v409
        %868 = vmatpush1.msra.mxu0 %v408
        %869 = vmatprep.subr.mxu0 %v405
        %870 = vmatpush1.msra.mxu0 %v404
        %871 = vmatprep.subr.mxu0 %v401
        %872 = vmatpush1.msra.mxu0 %v400
        %873 = vmatprep.subr.mxu0 %v397
        %874 = vmatpush1.msra.mxu0 %v396
        %875 = vmatprep.subr.mxu0 %v393
        %876 = vmatpush1.msra.mxu0 %v392
        %877 = vmatprep.subr.mxu0 %v389
        %878 = vmatpush1.msra.mxu0 %v388
        %879 = vmatprep.subr.mxu0 %v385
        %880 = vmatpush1.msra.mxu0 %v384
        %881 = vmatprep.subr.mxu0 %v381
        %882 = vmatpush1.msra.mxu0 %v380
        %883 = vmatprep.subr.mxu0 %v377
        %884 = vmatpush1.msra.mxu0 %v376
        %885 = vmatprep.subr.mxu0 %v501
        %886 = vmatpush2.msra.mxu0 %v500
        %887 = vmatprep.subr.mxu0 %v497
        %888 = vmatpush2.msra.mxu0 %v496
        %889 = vmatprep.subr.mxu0 %v493
        %890 = vmatpush2.msra.mxu0 %v492
        %891 = vmatprep.subr.mxu0 %v489
        %892 = vmatpush2.msra.mxu0 %v488
        %893 = vmatprep.subr.mxu0 %v485
        %894 = vmatpush2.msra.mxu0 %v484
        %895 = vmatprep.subr.mxu0 %v481
        %896 = vmatpush2.msra.mxu0 %v480
        %897 = vmatprep.subr.mxu0 %v477
        %898 = vmatpush2.msra.mxu0 %v476
        %899 = vmatprep.subr.mxu0 %v473
        %900 = vmatpush2.msra.mxu0 %v472
        %901 = vmatprep.subr.mxu0 %v469
        %902 = vmatpush2.msra.mxu0 %v468
        %903 = vmatprep.subr.mxu0 %v465
        %904 = vmatpush2.msra.mxu0 %v464
        %905 = vmatprep.subr.mxu0 %v461
        %906 = vmatpush2.msra.mxu0 %v460
        %907 = vmatprep.subr.mxu0 %v457
        %908 = vmatpush2.msra.mxu0 %v456
        %909 = vmatprep.subr.mxu0 %v453
        %910 = vmatpush2.msra.mxu0 %v452
        %911 = vmatprep.subr.mxu0 %v449
        %912 = vmatpush2.msra.mxu0 %v448
        %913 = vmatprep.subr.mxu0 %v445
        %914 = vmatpush2.msra.mxu0 %v444
        %915 = vmatprep.subr.mxu0 %v441
        %916 = vmatpush2.msra.mxu0 %v440
        %917 = vmatprep.mubr.f32.mxu0 %v243
        %918 = vmatmul.mubr.f32.gmra.mxu0 %v242
        %v919 = vpop.f32.mrf.mxu0
        %v920 = vadd.f32 %v849, %v919
        %v921 = vpop.f32.mrf.mxu0
        %v922 = vadd.f32 %v851, %v921
        %923 = vdwg.mxu0
        %924 = vmatprep.subr.mxu0 %v565
        %925 = vmatpush1.msra.mxu0 %v564
        %926 = vmatprep.subr.mxu0 %v561
        %927 = vmatpush1.msra.mxu0 %v560
        %928 = vmatprep.subr.mxu0 %v557
        %929 = vmatpush1.msra.mxu0 %v556
        %930 = vmatprep.subr.mxu0 %v553
        %931 = vmatpush1.msra.mxu0 %v552
        %932 = vmatprep.subr.mxu0 %v549
        %933 = vmatpush1.msra.mxu0 %v548
        %934 = vmatprep.subr.mxu0 %v545
        %935 = vmatpush1.msra.mxu0 %v544
        %936 = vmatprep.subr.mxu0 %v541
        %937 = vmatpush1.msra.mxu0 %v540
        %938 = vmatprep.subr.mxu0 %v537
        %939 = vmatpush1.msra.mxu0 %v536
        %940 = vmatprep.subr.mxu0 %v533
        %941 = vmatpush1.msra.mxu0 %v532
        %942 = vmatprep.subr.mxu0 %v529
        %943 = vmatpush1.msra.mxu0 %v528
        %944 = vmatprep.subr.mxu0 %v525
        %945 = vmatpush1.msra.mxu0 %v524
        %946 = vmatprep.subr.mxu0 %v521
        %947 = vmatpush1.msra.mxu0 %v520
        %948 = vmatprep.subr.mxu0 %v517
        %949 = vmatpush1.msra.mxu0 %v516
        %950 = vmatprep.subr.mxu0 %v513
        %951 = vmatpush1.msra.mxu0 %v512
        %952 = vmatprep.subr.mxu0 %v509
        %953 = vmatpush1.msra.mxu0 %v508
        %954 = vmatprep.subr.mxu0 %v505
        %955 = vmatpush1.msra.mxu0 %v504
        %956 = vmatprep.subr.mxu0 %v629
        %957 = vmatpush2.msra.mxu0 %v628
        %958 = vmatprep.subr.mxu0 %v625
        %959 = vmatpush2.msra.mxu0 %v624
        %960 = vmatprep.subr.mxu0 %v621
        %961 = vmatpush2.msra.mxu0 %v620
        %962 = vmatprep.subr.mxu0 %v617
        %963 = vmatpush2.msra.mxu0 %v616
        %964 = vmatprep.subr.mxu0 %v613
        %965 = vmatpush2.msra.mxu0 %v612
        %966 = vmatprep.subr.mxu0 %v609
        %967 = vmatpush2.msra.mxu0 %v608
        %968 = vmatprep.subr.mxu0 %v605
        %969 = vmatpush2.msra.mxu0 %v604
        %970 = vmatprep.subr.mxu0 %v601
        %971 = vmatpush2.msra.mxu0 %v600
        %972 = vmatprep.subr.mxu0 %v597
        %973 = vmatpush2.msra.mxu0 %v596
        %974 = vmatprep.subr.mxu0 %v593
        %975 = vmatpush2.msra.mxu0 %v592
        %976 = vmatprep.subr.mxu0 %v589
        %977 = vmatpush2.msra.mxu0 %v588
        %978 = vmatprep.subr.mxu0 %v585
        %979 = vmatpush2.msra.mxu0 %v584
        %980 = vmatprep.subr.mxu0 %v581
        %981 = vmatpush2.msra.mxu0 %v580
        %982 = vmatprep.subr.mxu0 %v577
        %983 = vmatpush2.msra.mxu0 %v576
        %984 = vmatprep.subr.mxu0 %v573
        %985 = vmatpush2.msra.mxu0 %v572
        %986 = vmatprep.subr.mxu0 %v569
        %987 = vmatpush2.msra.mxu0 %v568
        %988 = vmatprep.mubr.f32.mxu0 %v245
        %989 = vmatmul.mubr.f32.gmra.mxu0 %v244
        %v990 = vpop.f32.mrf.mxu0
        %v991 = vadd.f32 %v920, %v990
        %v992 = vpop.f32.mrf.mxu0
        %v993 = vadd.f32 %v922, %v992
        %994 = vdwg.mxu0
        %995 = vmatprep.subr.mxu0 %v693
        %996 = vmatpush1.msra.mxu0 %v692
        %997 = vmatprep.subr.mxu0 %v689
        %998 = vmatpush1.msra.mxu0 %v688
        %999 = vmatprep.subr.mxu0 %v685
        %1000 = vmatpush1.msra.mxu0 %v684
        %1001 = vmatprep.subr.mxu0 %v681
        %1002 = vmatpush1.msra.mxu0 %v680
        %1003 = vmatprep.subr.mxu0 %v677
        %1004 = vmatpush1.msra.mxu0 %v676
        %1005 = vmatprep.subr.mxu0 %v673
        %1006 = vmatpush1.msra.mxu0 %v672
        %1007 = vmatprep.subr.mxu0 %v669
        %1008 = vmatpush1.msra.mxu0 %v668
        %1009 = vmatprep.subr.mxu0 %v665
        %1010 = vmatpush1.msra.mxu0 %v664
        %1011 = vmatprep.subr.mxu0 %v661
        %1012 = vmatpush1.msra.mxu0 %v660
        %1013 = vmatprep.subr.mxu0 %v657
        %1014 = vmatpush1.msra.mxu0 %v656
        %1015 = vmatprep.subr.mxu0 %v653
        %1016 = vmatpush1.msra.mxu0 %v652
        %1017 = vmatprep.subr.mxu0 %v649
        %1018 = vmatpush1.msra.mxu0 %v648
        %1019 = vmatprep.subr.mxu0 %v645
        %1020 = vmatpush1.msra.mxu0 %v644
        %1021 = vmatprep.subr.mxu0 %v641
        %1022 = vmatpush1.msra.mxu0 %v640
        %1023 = vmatprep.subr.mxu0 %v637
        %1024 = vmatpush1.msra.mxu0 %v636
        %1025 = vmatprep.subr.mxu0 %v633
        %1026 = vmatpush1.msra.mxu0 %v632
        %1027 = vmatprep.subr.mxu0 %v757
        %1028 = vmatpush2.msra.mxu0 %v756
        %1029 = vmatprep.subr.mxu0 %v753
        %1030 = vmatpush2.msra.mxu0 %v752
        %1031 = vmatprep.subr.mxu0 %v749
        %1032 = vmatpush2.msra.mxu0 %v748
        %1033 = vmatprep.subr.mxu0 %v745
        %1034 = vmatpush2.msra.mxu0 %v744
        %1035 = vmatprep.subr.mxu0 %v741
        %1036 = vmatpush2.msra.mxu0 %v740
        %1037 = vmatprep.subr.mxu0 %v737
        %1038 = vmatpush2.msra.mxu0 %v736
        %1039 = vmatprep.subr.mxu0 %v733
        %1040 = vmatpush2.msra.mxu0 %v732
        %1041 = vmatprep.subr.mxu0 %v729
        %1042 = vmatpush2.msra.mxu0 %v728
        %1043 = vmatprep.subr.mxu0 %v725
        %1044 = vmatpush2.msra.mxu0 %v724
        %1045 = vmatprep.subr.mxu0 %v721
        %1046 = vmatpush2.msra.mxu0 %v720
        %1047 = vmatprep.subr.mxu0 %v717
        %1048 = vmatpush2.msra.mxu0 %v716
        %1049 = vmatprep.subr.mxu0 %v713
        %1050 = vmatpush2.msra.mxu0 %v712
        %1051 = vmatprep.subr.mxu0 %v709
        %1052 = vmatpush2.msra.mxu0 %v708
        %1053 = vmatprep.subr.mxu0 %v705
        %1054 = vmatpush2.msra.mxu0 %v704
        %1055 = vmatprep.subr.mxu0 %v701
        %1056 = vmatpush2.msra.mxu0 %v700
        %1057 = vmatprep.subr.mxu0 %v697
        %1058 = vmatpush2.msra.mxu0 %v696
        %1059 = vmatprep.mubr.f32.mxu0 %v247
        %1060 = vmatmul.mubr.f32.gmra.mxu0 %v246
        %v1061 = vpop.f32.mrf.mxu0
        %v1062 = vadd.f32 %v991, %v1061
        %v1063 = vpop.f32.mrf.mxu0
        %v1064 = vadd.f32 %v993, %v1063
        %1065 = vdwg.mxu0
        %1066 = vmatprep.subr.mxu0 %v311
        %1067 = vmatpush1.msra.mxu0 %v310
        %1068 = vmatprep.subr.mxu0 %v307
        %1069 = vmatpush1.msra.mxu0 %v306
        %1070 = vmatprep.subr.mxu0 %v303
        %1071 = vmatpush1.msra.mxu0 %v302
        %1072 = vmatprep.subr.mxu0 %v299
        %1073 = vmatpush1.msra.mxu0 %v298
        %1074 = vmatprep.subr.mxu0 %v295
        %1075 = vmatpush1.msra.mxu0 %v294
        %1076 = vmatprep.subr.mxu0 %v291
        %1077 = vmatpush1.msra.mxu0 %v290
        %1078 = vmatprep.subr.mxu0 %v287
        %1079 = vmatpush1.msra.mxu0 %v286
        %1080 = vmatprep.subr.mxu0 %v283
        %1081 = vmatpush1.msra.mxu0 %v282
        %1082 = vmatprep.subr.mxu0 %v279
        %1083 = vmatpush1.msra.mxu0 %v278
        %1084 = vmatprep.subr.mxu0 %v275
        %1085 = vmatpush1.msra.mxu0 %v274
        %1086 = vmatprep.subr.mxu0 %v271
        %1087 = vmatpush1.msra.mxu0 %v270
        %1088 = vmatprep.subr.mxu0 %v267
        %1089 = vmatpush1.msra.mxu0 %v266
        %1090 = vmatprep.subr.mxu0 %v263
        %1091 = vmatpush1.msra.mxu0 %v262
        %1092 = vmatprep.subr.mxu0 %v259
        %1093 = vmatpush1.msra.mxu0 %v258
        %1094 = vmatprep.subr.mxu0 %v255
        %1095 = vmatpush1.msra.mxu0 %v254
        %1096 = vmatprep.subr.mxu0 %v251
        %1097 = vmatpush1.msra.mxu0 %v250
        %1098 = vmatprep.subr.mxu0 %v375
        %1099 = vmatpush2.msra.mxu0 %v374
        %1100 = vmatprep.subr.mxu0 %v371
        %1101 = vmatpush2.msra.mxu0 %v370
        %1102 = vmatprep.subr.mxu0 %v367
        %1103 = vmatpush2.msra.mxu0 %v366
        %1104 = vmatprep.subr.mxu0 %v363
        %1105 = vmatpush2.msra.mxu0 %v362
        %1106 = vmatprep.subr.mxu0 %v359
        %1107 = vmatpush2.msra.mxu0 %v358
        %1108 = vmatprep.subr.mxu0 %v355
        %1109 = vmatpush2.msra.mxu0 %v354
        %1110 = vmatprep.subr.mxu0 %v351
        %1111 = vmatpush2.msra.mxu0 %v350
        %1112 = vmatprep.subr.mxu0 %v347
        %1113 = vmatpush2.msra.mxu0 %v346
        %1114 = vmatprep.subr.mxu0 %v343
        %1115 = vmatpush2.msra.mxu0 %v342
        %1116 = vmatprep.subr.mxu0 %v339
        %1117 = vmatpush2.msra.mxu0 %v338
        %1118 = vmatprep.subr.mxu0 %v335
        %1119 = vmatpush2.msra.mxu0 %v334
        %1120 = vmatprep.subr.mxu0 %v331
        %1121 = vmatpush2.msra.mxu0 %v330
        %1122 = vmatprep.subr.mxu0 %v327
        %1123 = vmatpush2.msra.mxu0 %v326
        %1124 = vmatprep.subr.mxu0 %v323
        %1125 = vmatpush2.msra.mxu0 %v322
        %1126 = vmatprep.subr.mxu0 %v319
        %1127 = vmatpush2.msra.mxu0 %v318
        %1128 = vmatprep.subr.mxu0 %v315
        %1129 = vmatpush2.msra.mxu0 %v314
        %1130 = vmatprep.mubr.f32.mxu0 %v241
        %1131 = vmatmul.mubr.f32.gmra.mxu0 %v240
        %v1132 = vpop.f32.mrf.mxu0
        %v1133 = vadd.f32 %v773, %v1132
        %v1134 = vpop.f32.mrf.mxu0
        %v1135 = vadd.f32 %v777, %v1134
        %1136 = vdwg.mxu0
        %1137 = vmatprep.subr.mxu0 %v439
        %1138 = vmatpush1.msra.mxu0 %v438
        %1139 = vmatprep.subr.mxu0 %v435
        %1140 = vmatpush1.msra.mxu0 %v434
        %1141 = vmatprep.subr.mxu0 %v431
        %1142 = vmatpush1.msra.mxu0 %v430
        %1143 = vmatprep.subr.mxu0 %v427
        %1144 = vmatpush1.msra.mxu0 %v426
        %1145 = vmatprep.subr.mxu0 %v423
        %1146 = vmatpush1.msra.mxu0 %v422
        %1147 = vmatprep.subr.mxu0 %v419
        %1148 = vmatpush1.msra.mxu0 %v418
        %1149 = vmatprep.subr.mxu0 %v415
        %1150 = vmatpush1.msra.mxu0 %v414
        %1151 = vmatprep.subr.mxu0 %v411
        %1152 = vmatpush1.msra.mxu0 %v410
        %1153 = vmatprep.subr.mxu0 %v407
        %1154 = vmatpush1.msra.mxu0 %v406
        %1155 = vmatprep.subr.mxu0 %v403
        %1156 = vmatpush1.msra.mxu0 %v402
        %1157 = vmatprep.subr.mxu0 %v399
        %1158 = vmatpush1.msra.mxu0 %v398
        %1159 = vmatprep.subr.mxu0 %v395
        %1160 = vmatpush1.msra.mxu0 %v394
        %1161 = vmatprep.subr.mxu0 %v391
        %1162 = vmatpush1.msra.mxu0 %v390
        %1163 = vmatprep.subr.mxu0 %v387
        %1164 = vmatpush1.msra.mxu0 %v386
        %1165 = vmatprep.subr.mxu0 %v383
        %1166 = vmatpush1.msra.mxu0 %v382
        %1167 = vmatprep.subr.mxu0 %v379
        %1168 = vmatpush1.msra.mxu0 %v378
        %1169 = vmatprep.subr.mxu0 %v503
        %1170 = vmatpush2.msra.mxu0 %v502
        %1171 = vmatprep.subr.mxu0 %v499
        %1172 = vmatpush2.msra.mxu0 %v498
        %1173 = vmatprep.subr.mxu0 %v495
        %1174 = vmatpush2.msra.mxu0 %v494
        %1175 = vmatprep.subr.mxu0 %v491
        %1176 = vmatpush2.msra.mxu0 %v490
        %1177 = vmatprep.subr.mxu0 %v487
        %1178 = vmatpush2.msra.mxu0 %v486
        %1179 = vmatprep.subr.mxu0 %v483
        %1180 = vmatpush2.msra.mxu0 %v482
        %1181 = vmatprep.subr.mxu0 %v479
        %1182 = vmatpush2.msra.mxu0 %v478
        %1183 = vmatprep.subr.mxu0 %v475
        %1184 = vmatpush2.msra.mxu0 %v474
        %1185 = vmatprep.subr.mxu0 %v471
        %1186 = vmatpush2.msra.mxu0 %v470
        %1187 = vmatprep.subr.mxu0 %v467
        %1188 = vmatpush2.msra.mxu0 %v466
        %1189 = vmatprep.subr.mxu0 %v463
        %1190 = vmatpush2.msra.mxu0 %v462
        %1191 = vmatprep.subr.mxu0 %v459
        %1192 = vmatpush2.msra.mxu0 %v458
        %1193 = vmatprep.subr.mxu0 %v455
        %1194 = vmatpush2.msra.mxu0 %v454
        %1195 = vmatprep.subr.mxu0 %v451
        %1196 = vmatpush2.msra.mxu0 %v450
        %1197 = vmatprep.subr.mxu0 %v447
        %1198 = vmatpush2.msra.mxu0 %v446
        %1199 = vmatprep.subr.mxu0 %v443
        %1200 = vmatpush2.msra.mxu0 %v442
        %1201 = vmatprep.mubr.f32.mxu0 %v243
        %1202 = vmatmul.mubr.f32.gmra.mxu0 %v242
        %v1203 = vpop.f32.mrf.mxu0
        %v1204 = vadd.f32 %v1133, %v1203
        %v1205 = vpop.f32.mrf.mxu0
        %v1206 = vadd.f32 %v1135, %v1205
        %1207 = vdwg.mxu0
        %1208 = vmatprep.subr.mxu0 %v567
        %1209 = vmatpush1.msra.mxu0 %v566
        %1210 = vmatprep.subr.mxu0 %v563
        %1211 = vmatpush1.msra.mxu0 %v562
        %1212 = vmatprep.subr.mxu0 %v559
        %1213 = vmatpush1.msra.mxu0 %v558
        %1214 = vmatprep.subr.mxu0 %v555
        %1215 = vmatpush1.msra.mxu0 %v554
        %1216 = vmatprep.subr.mxu0 %v551
        %1217 = vmatpush1.msra.mxu0 %v550
        %1218 = vmatprep.subr.mxu0 %v547
        %1219 = vmatpush1.msra.mxu0 %v546
        %1220 = vmatprep.subr.mxu0 %v543
        %1221 = vmatpush1.msra.mxu0 %v542
        %1222 = vmatprep.subr.mxu0 %v539
        %1223 = vmatpush1.msra.mxu0 %v538
        %1224 = vmatprep.subr.mxu0 %v535
        %1225 = vmatpush1.msra.mxu0 %v534
        %1226 = vmatprep.subr.mxu0 %v531
        %1227 = vmatpush1.msra.mxu0 %v530
        %1228 = vmatprep.subr.mxu0 %v527
        %1229 = vmatpush1.msra.mxu0 %v526
        %1230 = vmatprep.subr.mxu0 %v523
        %1231 = vmatpush1.msra.mxu0 %v522
        %1232 = vmatprep.subr.mxu0 %v519
        %1233 = vmatpush1.msra.mxu0 %v518
        %1234 = vmatprep.subr.mxu0 %v515
        %1235 = vmatpush1.msra.mxu0 %v514
        %1236 = vmatprep.subr.mxu0 %v511
        %1237 = vmatpush1.msra.mxu0 %v510
        %1238 = vmatprep.subr.mxu0 %v507
        %1239 = vmatpush1.msra.mxu0 %v506
        %1240 = vmatprep.subr.mxu0 %v631
        %1241 = vmatpush2.msra.mxu0 %v630
        %1242 = vmatprep.subr.mxu0 %v627
        %1243 = vmatpush2.msra.mxu0 %v626
        %1244 = vmatprep.subr.mxu0 %v623
        %1245 = vmatpush2.msra.mxu0 %v622
        %1246 = vmatprep.subr.mxu0 %v619
        %1247 = vmatpush2.msra.mxu0 %v618
        %1248 = vmatprep.subr.mxu0 %v615
        %1249 = vmatpush2.msra.mxu0 %v614
        %1250 = vmatprep.subr.mxu0 %v611
        %1251 = vmatpush2.msra.mxu0 %v610
        %1252 = vmatprep.subr.mxu0 %v607
        %1253 = vmatpush2.msra.mxu0 %v606
        %1254 = vmatprep.subr.mxu0 %v603
        %1255 = vmatpush2.msra.mxu0 %v602
        %1256 = vmatprep.subr.mxu0 %v599
        %1257 = vmatpush2.msra.mxu0 %v598
        %1258 = vmatprep.subr.mxu0 %v595
        %1259 = vmatpush2.msra.mxu0 %v594
        %1260 = vmatprep.subr.mxu0 %v591
        %1261 = vmatpush2.msra.mxu0 %v590
        %1262 = vmatprep.subr.mxu0 %v587
        %1263 = vmatpush2.msra.mxu0 %v586
        %1264 = vmatprep.subr.mxu0 %v583
        %1265 = vmatpush2.msra.mxu0 %v582
        %1266 = vmatprep.subr.mxu0 %v579
        %1267 = vmatpush2.msra.mxu0 %v578
        %1268 = vmatprep.subr.mxu0 %v575
        %1269 = vmatpush2.msra.mxu0 %v574
        %1270 = vmatprep.subr.mxu0 %v571
        %1271 = vmatpush2.msra.mxu0 %v570
        %1272 = vmatprep.mubr.f32.mxu0 %v245
        %1273 = vmatmul.mubr.f32.gmra.mxu0 %v244
        %v1274 = vpop.f32.mrf.mxu0
        %v1275 = vadd.f32 %v1204, %v1274
        %v1276 = vpop.f32.mrf.mxu0
        %v1277 = vadd.f32 %v1206, %v1276
        %1278 = vdwg.mxu0
        %1279 = vmatprep.subr.mxu0 %v695
        %1280 = vmatpush1.msra.mxu0 %v694
        %1281 = vmatprep.subr.mxu0 %v691
        %1282 = vmatpush1.msra.mxu0 %v690
        %1283 = vmatprep.subr.mxu0 %v687
        %1284 = vmatpush1.msra.mxu0 %v686
        %1285 = vmatprep.subr.mxu0 %v683
        %1286 = vmatpush1.msra.mxu0 %v682
        %1287 = vmatprep.subr.mxu0 %v679
        %1288 = vmatpush1.msra.mxu0 %v678
        %1289 = vmatprep.subr.mxu0 %v675
        %1290 = vmatpush1.msra.mxu0 %v674
        %1291 = vmatprep.subr.mxu0 %v671
        %1292 = vmatpush1.msra.mxu0 %v670
        %1293 = vmatprep.subr.mxu0 %v667
        %1294 = vmatpush1.msra.mxu0 %v666
        %1295 = vmatprep.subr.mxu0 %v663
        %1296 = vmatpush1.msra.mxu0 %v662
        %1297 = vmatprep.subr.mxu0 %v659
        %1298 = vmatpush1.msra.mxu0 %v658
        %1299 = vmatprep.subr.mxu0 %v655
        %1300 = vmatpush1.msra.mxu0 %v654
        %1301 = vmatprep.subr.mxu0 %v651
        %1302 = vmatpush1.msra.mxu0 %v650
        %1303 = vmatprep.subr.mxu0 %v647
        %1304 = vmatpush1.msra.mxu0 %v646
        %1305 = vmatprep.subr.mxu0 %v643
        %1306 = vmatpush1.msra.mxu0 %v642
        %1307 = vmatprep.subr.mxu0 %v639
        %1308 = vmatpush1.msra.mxu0 %v638
        %1309 = vmatprep.subr.mxu0 %v635
        %1310 = vmatpush1.msra.mxu0 %v634
        %1311 = vmatprep.subr.mxu0 %v759
        %1312 = vmatpush2.msra.mxu0 %v758
        %1313 = vmatprep.subr.mxu0 %v755
        %1314 = vmatpush2.msra.mxu0 %v754
        %1315 = vmatprep.subr.mxu0 %v751
        %1316 = vmatpush2.msra.mxu0 %v750
        %1317 = vmatprep.subr.mxu0 %v747
        %1318 = vmatpush2.msra.mxu0 %v746
        %1319 = vmatprep.subr.mxu0 %v743
        %1320 = vmatpush2.msra.mxu0 %v742
        %1321 = vmatprep.subr.mxu0 %v739
        %1322 = vmatpush2.msra.mxu0 %v738
        %1323 = vmatprep.subr.mxu0 %v735
        %1324 = vmatpush2.msra.mxu0 %v734
        %1325 = vmatprep.subr.mxu0 %v731
        %1326 = vmatpush2.msra.mxu0 %v730
        %1327 = vmatprep.subr.mxu0 %v727
        %1328 = vmatpush2.msra.mxu0 %v726
        %1329 = vmatprep.subr.mxu0 %v723
        %1330 = vmatpush2.msra.mxu0 %v722
        %1331 = vmatprep.subr.mxu0 %v719
        %1332 = vmatpush2.msra.mxu0 %v718
        %1333 = vmatprep.subr.mxu0 %v715
        %1334 = vmatpush2.msra.mxu0 %v714
        %1335 = vmatprep.subr.mxu0 %v711
        %1336 = vmatpush2.msra.mxu0 %v710
        %1337 = vmatprep.subr.mxu0 %v707
        %1338 = vmatpush2.msra.mxu0 %v706
        %1339 = vmatprep.subr.mxu0 %v703
        %1340 = vmatpush2.msra.mxu0 %v702
        %1341 = vmatprep.subr.mxu0 %v699
        %1342 = vmatpush2.msra.mxu0 %v698
        %1343 = vmatprep.mubr.f32.mxu0 %v247
        %1344 = vmatmul.mubr.f32.gmra.mxu0 %v246
        %v1345 = vpop.f32.mrf.mxu0
        %v1346 = vadd.f32 %v1275, %v1345
        %v1347 = vpop.f32.mrf.mxu0
        %v1348 = vadd.f32 %v1277, %v1347
        %1349 = vdwg.mxu0
        %1350 = vst [vmem:[%s236] sm:$0xff] %v1062
        %1351 = vst [vmem:[%s236 + $0x8] sm:$0xff] %v1064
        %1352 = vst [vmem:[%s236 + $0x10] sm:$0xff] %v1346
        %1353 = vst [vmem:[%s236 + $0x18] sm:$0xff] %v1348
        %s1354 = sand.u32 %s102, 1
        %s1355 = scalar_lea.sflag [#allocation4], %s1354
        %s1356 = sand.u32 %s102, 1
        %s1357 = smul.addr %s1356, 32
        %s1358 = scalar_lea.vmem [#allocation8], %s1357
        // Predicated region
        $region45: #{tpu_custom_call.1} parent=31 // pred_check
          %p1359 = pneg %p112
        $region46: #{tpu_custom_call.1} parent=31 // pred_check_branch
          %1361 = sbr.rel (%p1359) target = $region48
        $region47: #{tpu_custom_call.1} parent=31 // pred_region
          %s1362 = smul.u32 4, %s21
          %s1364 = ssub.s32 512, 512
          %1365 = vsyncadd %s1355, %s1364
          %s1366 = smul.addr %s1362, 128
          %s1367 = scalar_lea.hbm %s3, %s1366
          %s1369 = sshll.u32 %s1358, 4
          %s1370 = int_to_ptr.vmem [resolvable:$true] %s1369
          %1372 = dma.vmem_to_hbm [thread:$0]  %s1370, 512, %s1367, %s1355
        $region48: #{tpu_custom_call.1} parent=31 // pred_fallthru
          _
      $region32: #{tpu_custom_call.1} parent=5 // pred_fallthru
        _
      %p1373 = scmp.le.s32.totalorder 2, %s16
      // Predicated region
      $region49: #{tpu_custom_call.1} parent=5 // pred_check
        %p1374 = pneg %p1373
      $region50: #{tpu_custom_call.1} parent=5 // pred_check_branch
        %1376 = sbr.rel (%p1374) target = $region52
      $region51: #{tpu_custom_call.1} parent=5 // pred_region
        %s1377 = ssub.s32 %s16, 2
        // Predicated region
        $region53: #{tpu_custom_call.1} parent=51 // pred_check
          %p1378 = pneg %p118
        $region54: #{tpu_custom_call.1} parent=51 // pred_check_branch
          %1380 = sbr.rel (%p1378) target = $region56
        $region55: #{tpu_custom_call.1} parent=51 // pred_region
          %s1381 = sand.u32 %s103, 1
          %s1382 = scalar_lea.sflag [#allocation4], %s1381
          %s1383 = sand.u32 %s103, 1
          %s1384 = smul.addr %s1383, 32
          %s1385 = scalar_lea.vmem [#allocation8], %s1384
          %1386 = dma.done %s1382, 512
        $region56: #{tpu_custom_call.1} parent=51 // pred_fallthru
          _
      $region52: #{tpu_custom_call.1} parent=5 // pred_fallthru
        _
    $region6: #{tpu_custom_call.1} parent=1 // loop_footer
      %s20 = sadd.s32 1, %s16
    $region7: #{tpu_custom_call.1} parent=1 // loop_footer_branch
      %15 = sbr.rel target = $region3
    $region8: #{tpu_custom_call.1} parent=1 // loop_exit
      _
    %1387 = vsyncpa [#allocation3], 1
    %s1388 = scalar_lea.sflag [#allocation3], 1
    %1389 = vsyncpa %s1388, 1
    %1390 = vsyncpa [#allocation6], 1
    %s1391 = scalar_lea.sflag [#allocation6], 1
    %1392 = vsyncpa %s1391, 1
    %1393 = vsyncpa [#allocation4], 1
    %s1394 = scalar_lea.sflag [#allocation4], 1
    %1395 = vsyncpa %s1394, 1

</llo_original>
